<compile_context>
chip_gen: v7x
topology: tpu7x:2x2x1
jax: 0.10.0
libtpu: 0.0.40
codegen_flags: <defaults>
</compile_context>

<pallas_src>
import functools

import jax
import jax.numpy as jnp
from jax.experimental import pallas as pl
from jax.experimental.pallas import tpu as pltpu

D_IN = 784       # 28*28, unpadded (block covers the full dim; K contracted directly)
D_H1 = 512
D_H2 = 256
D_H3 = 128
D_OUT_PAD = 128  # 10 padded to full lane width for a dense output slab
D_OUT = 10


def _round_up(x, m):
    return ((x + m - 1) // m) * m


def _mlp_kernel(x_ref,
                w1_ref, b1_ref,
                w2_ref, b2_ref,
                w3_ref, b3_ref,
                w4_ref, b4_ref,
                o_ref):
    # Fused cast: x arrives f32 (TB, 784); cast to bf16 in VMEM (no extra HBM
    # pass).  Mosaic masks the ragged lanes of the last 128-wide K chunk.
    x = x_ref[...].astype(jnp.bfloat16)
    # Layer 1: (TB,784)bf16 @ (784,512)bf16 -> f32 acc, +bias, ReLU
    h = jnp.dot(x, w1_ref[...], preferred_element_type=jnp.float32)
    h = jnp.maximum(h + b1_ref[...], 0.0)
    # Layer 2: (TB,512) @ (512,256)
    h = jnp.dot(h.astype(jnp.bfloat16), w2_ref[...],
                preferred_element_type=jnp.float32)
    h = jnp.maximum(h + b2_ref[...], 0.0)
    # Layer 3: (TB,256) @ (256,128)
    h = jnp.dot(h.astype(jnp.bfloat16), w3_ref[...],
                preferred_element_type=jnp.float32)
    h = jnp.maximum(h + b3_ref[...], 0.0)
    # Output layer: (TB,128) @ (128,128)   (N padded 10->128; no activation)
    h = jnp.dot(h.astype(jnp.bfloat16), w4_ref[...],
                preferred_element_type=jnp.float32)
    o_ref[...] = (h + b4_ref[...]).astype(o_ref.dtype)


def prepare_params(params):
    """One-time prep: transpose to [in,out], pad last-layer N 10->128, cast bf16.

    `params` follow the PyTorch convention: w_i is (out_features, in_features),
    b_i is (out_features,).  Biases stay f32 (added to the f32 accumulator).
    """
    w1 = params["w1"].T                                          # (784, 512)
    w2 = params["w2"].T                                          # (512, 256)
    w3 = params["w3"].T                                          # (256, 128)
    w4 = jnp.pad(params["w4"].T, ((0, 0), (0, D_OUT_PAD - D_OUT)))  # (128, 128)

    b1 = params["b1"].reshape(1, -1).astype(jnp.float32)
    b2 = params["b2"].reshape(1, -1).astype(jnp.float32)
    b3 = params["b3"].reshape(1, -1).astype(jnp.float32)
    b4 = jnp.pad(params["b4"].reshape(1, -1),
                 ((0, 0), (0, D_OUT_PAD - D_OUT))).astype(jnp.float32)

    return dict(
        w1=w1.astype(jnp.bfloat16), b1=b1,
        w2=w2.astype(jnp.bfloat16), b2=b2,
        w3=w3.astype(jnp.bfloat16), b3=b3,
        w4=w4.astype(jnp.bfloat16), b4=b4,
    )


@functools.partial(jax.jit, static_argnames=("max_tile",))
def simple_mlp_forward(x, prepared, *, max_tile=512):
    """x: [B, ...] (flattened to [B, 784]). prepared: output of prepare_params."""
    B = x.shape[0]
    x_flat = x.reshape(B, -1).astype(jnp.float32)   # x.view(x.size(0), -1); no HBM pad/cast pass

    # Batch tile: balanced across ceil(B/max_tile) grid steps, rounded to 16
    # rows (bf16 sublane packing; 8 for tiny batches).  At max_tile=512 the
    # whole pipeline is ~8.5 MiB of VMEM -> fits every generation's default
    # scoped limit.  If raising max_tile to 1024, also raise
    # pltpu.CompilerParams(vmem_limit_bytes=...) on v5e.
    granule = 16 if B >= 16 else 8
    num_tiles = pl.cdiv(B, max_tile)
    TB = min(max_tile, _round_up(pl.cdiv(B, num_tiles), granule))
    grid = (pl.cdiv(B, TB),)

    resident = lambda shape: pl.BlockSpec(shape, lambda i: (0, 0))

    weight_bytes = int(sum(int(v.size) * v.dtype.itemsize for v in prepared.values()))
    cost = pl.CostEstimate(
        flops=2 * B * (D_IN * D_H1 + D_H1 * D_H2 + D_H2 * D_H3 + D_H3 * D_OUT),
        transcendentals=0,
        bytes_accessed=B * D_IN * 4 + B * D_OUT_PAD * 4 + weight_bytes,
    )

    out_padded = pl.pallas_call(
        _mlp_kernel,
        out_shape=jax.ShapeDtypeStruct((B, D_OUT_PAD), jnp.float32),
        grid=grid,
        in_specs=[
            pl.BlockSpec((TB, D_IN), lambda i: (i, 0)),            # x tile (ragged last block masked)
            resident((D_IN, D_H1)), resident((1, D_H1)),           # layer 1
            resident((D_H1, D_H2)), resident((1, D_H2)),           # layer 2
            resident((D_H2, D_H3)), resident((1, D_H3)),           # layer 3
            resident((D_H3, D_OUT_PAD)), resident((1, D_OUT_PAD)),  # out layer
        ],
        out_specs=pl.BlockSpec((TB, D_OUT_PAD), lambda i: (i, 0)),
        compiler_params=pltpu.CompilerParams(
            dimension_semantics=("parallel",)),
        cost_estimate=cost,
    )(x_flat,
      prepared["w1"], prepared["b1"],
      prepared["w2"], prepared["b2"],
      prepared["w3"], prepared["b3"],
      prepared["w4"], prepared["b4"])

    # Strip the padded logit columns (no batch padding to strip).
    return out_padded[:, :D_OUT]


def init_params(key):
    """Deterministic init matching nn.Linear shapes (out_features, in_features)."""
    sizes = [(512, 784), (256, 512), (128, 256), (10, 128)]
    params = {}
    for i, (out_f, in_f) in enumerate(sizes, start=1):
        key, kw, kb = jax.random.split(key, 3)
        bound = 1.0 / jnp.sqrt(in_f)
        params[f"w{i}"] = jax.random.uniform(
            kw, (out_f, in_f), jnp.float32, minval=-bound, maxval=bound)
        params[f"b{i}"] = jax.random.uniform(
            kb, (out_f,), jnp.float32, minval=-bound, maxval=bound)
    return params


def reference_forward(x, params):
    """Pure-JAX f32 reference of the PyTorch forward."""
    h = x.reshape(x.shape[0], -1)
    for i in range(1, 4):
        h = jnp.maximum(h @ params[f"w{i}"].T + params[f"b{i}"], 0.0)
    return h @ params["w4"].T + params["b4"]


if __name__ == "__main__":
    key = jax.random.PRNGKey(0)
    kp, kx = jax.random.split(key)
    params = init_params(kp)
    prepared = prepare_params(params)   # one-time weight prep (not per forward)

    # Small batch; input is a 1x28x28 image per example (= 784 features).
    B = 8
    x = jax.random.normal(kx, (B, 1, 28, 28), jnp.float32)

    out = simple_mlp_forward(x, prepared)
    out = jax.block_until_ready(out)

    ref = reference_forward(x, params)
    assert out.shape == (B, 10), out.shape
    # bf16 weights/activations with f32 accumulation -> loosened tolerance.
    max_err = float(jnp.max(jnp.abs(out - ref)))
    assert max_err < 1e-1, f"max abs error too large: {max_err}"

    print("KERNEL_OK")
</pallas_src>

<mosaic_0001>
module attributes {stable_mosaic.version = 11 : i64} {
  func.func @_mlp_kernel(%arg0: i32, %arg1: memref<8x784xf32, #tpu.memory_space<vmem>>, %arg2: memref<784x512xbf16, #tpu.memory_space<vmem>>, %arg3: memref<1x512xf32, #tpu.memory_space<vmem>>, %arg4: memref<512x256xbf16, #tpu.memory_space<vmem>>, %arg5: memref<1x256xf32, #tpu.memory_space<vmem>>, %arg6: memref<256x128xbf16, #tpu.memory_space<vmem>>, %arg7: memref<1x128xf32, #tpu.memory_space<vmem>>, %arg8: memref<128x128xbf16, #tpu.memory_space<vmem>>, %arg9: memref<1x128xf32, #tpu.memory_space<vmem>>, %arg10: memref<8x128xf32, #tpu.memory_space<vmem>>) attributes {dimension_semantics = [#tpu.dimension_semantics<parallel>], iteration_bounds = array<i64: 1>, scalar_prefetch = 0 : i64, scratch_operands = 0 : i64, tpu.core_type = #tpu.core_type<tc>, window_params = [{transform_indices = @transform_0, window_bounds = array<i64: 8, 784>}, {pipeline_mode = #tpu.pipeline_mode<synchronous>, transform_indices = @transform_1, window_bounds = array<i64: 784, 512>}, {pipeline_mode = #tpu.pipeline_mode<synchronous>, transform_indices = @transform_2, window_bounds = array<i64: 1, 512>}, {pipeline_mode = #tpu.pipeline_mode<synchronous>, transform_indices = @transform_3, window_bounds = array<i64: 512, 256>}, {pipeline_mode = #tpu.pipeline_mode<synchronous>, transform_indices = @transform_4, window_bounds = array<i64: 1, 256>}, {pipeline_mode = #tpu.pipeline_mode<synchronous>, transform_indices = @transform_5, window_bounds = array<i64: 256, 128>}, {pipeline_mode = #tpu.pipeline_mode<synchronous>, transform_indices = @transform_6, window_bounds = array<i64: 1, 128>}, {pipeline_mode = #tpu.pipeline_mode<synchronous>, transform_indices = @transform_7, window_bounds = array<i64: 128, 128>}, {pipeline_mode = #tpu.pipeline_mode<synchronous>, transform_indices = @transform_8, window_bounds = array<i64: 1, 128>}, {transform_indices = @transform_9, window_bounds = array<i64: 8, 128>}]} {
    %c0 = arith.constant 0 : index
    %c0_0 = arith.constant 0 : index
    %0 = vector.load %arg1[%c0, %c0_0] : memref<8x784xf32, #tpu.memory_space<vmem>>, vector<8x784xf32>
    %1 = arith.truncf %0 : vector<8x784xf32> to vector<8x784xbf16>
    %c0_1 = arith.constant 0 : index
    %c0_2 = arith.constant 0 : index
    %2 = vector.load %arg2[%c0_1, %c0_2] : memref<784x512xbf16, #tpu.memory_space<vmem>>, vector<784x512xbf16>
    %cst = arith.constant dense<0.000000e+00> : vector<8x512xf32>
    %3 = tpu.matmul %1, %2, %cst {dimension_numbers = #tpu.dot_dimension_numbers<[1], [0], [0], [1], [0, 0, 1, 1], [], []>} : vector<8x784xbf16>, vector<784x512xbf16>, vector<8x512xf32> -> vector<8x512xf32>
    %c0_3 = arith.constant 0 : index
    %c0_4 = arith.constant 0 : index
    %4 = vector.load %arg3[%c0_3, %c0_4] : memref<1x512xf32, #tpu.memory_space<vmem>>, vector<1x512xf32>
    %5 = vector.broadcast %4 : vector<1x512xf32> to vector<8x512xf32>
    %6 = arith.addf %3, %5 : vector<8x512xf32>
    %cst_5 = arith.constant 0.000000e+00 : f32
    %7 = vector.broadcast %cst_5 : f32 to vector<8x512xf32>
    %8 = arith.maximumf %6, %7 : vector<8x512xf32>
    %9 = arith.truncf %8 : vector<8x512xf32> to vector<8x512xbf16>
    %c0_6 = arith.constant 0 : index
    %c0_7 = arith.constant 0 : index
    %10 = vector.load %arg4[%c0_6, %c0_7] : memref<512x256xbf16, #tpu.memory_space<vmem>>, vector<512x256xbf16>
    %cst_8 = arith.constant dense<0.000000e+00> : vector<8x256xf32>
    %11 = tpu.matmul %9, %10, %cst_8 {dimension_numbers = #tpu.dot_dimension_numbers<[1], [0], [0], [1], [0, 0, 1, 1], [], []>} : vector<8x512xbf16>, vector<512x256xbf16>, vector<8x256xf32> -> vector<8x256xf32>
    %c0_9 = arith.constant 0 : index
    %c0_10 = arith.constant 0 : index
    %12 = vector.load %arg5[%c0_9, %c0_10] : memref<1x256xf32, #tpu.memory_space<vmem>>, vector<1x256xf32>
    %13 = vector.broadcast %12 : vector<1x256xf32> to vector<8x256xf32>
    %14 = arith.addf %11, %13 : vector<8x256xf32>
    %cst_11 = arith.constant 0.000000e+00 : f32
    %15 = vector.broadcast %cst_11 : f32 to vector<8x256xf32>
    %16 = arith.maximumf %14, %15 : vector<8x256xf32>
    %17 = arith.truncf %16 : vector<8x256xf32> to vector<8x256xbf16>
    %c0_12 = arith.constant 0 : index
    %c0_13 = arith.constant 0 : index
    %18 = vector.load %arg6[%c0_12, %c0_13] : memref<256x128xbf16, #tpu.memory_space<vmem>>, vector<256x128xbf16>
    %cst_14 = arith.constant dense<0.000000e+00> : vector<8x128xf32>
    %19 = tpu.matmul %17, %18, %cst_14 {dimension_numbers = #tpu.dot_dimension_numbers<[1], [0], [0], [1], [0, 0, 1, 1], [], []>} : vector<8x256xbf16>, vector<256x128xbf16>, vector<8x128xf32> -> vector<8x128xf32>
    %c0_15 = arith.constant 0 : index
    %c0_16 = arith.constant 0 : index
    %20 = vector.load %arg7[%c0_15, %c0_16] : memref<1x128xf32, #tpu.memory_space<vmem>>, vector<1x128xf32>
    %21 = vector.broadcast %20 : vector<1x128xf32> to vector<8x128xf32>
    %22 = arith.addf %19, %21 : vector<8x128xf32>
    %cst_17 = arith.constant 0.000000e+00 : f32
    %23 = vector.broadcast %cst_17 : f32 to vector<8x128xf32>
    %24 = arith.maximumf %22, %23 : vector<8x128xf32>
    %25 = arith.truncf %24 : vector<8x128xf32> to vector<8x128xbf16>
    %c0_18 = arith.constant 0 : index
    %c0_19 = arith.constant 0 : index
    %26 = vector.load %arg8[%c0_18, %c0_19] : memref<128x128xbf16, #tpu.memory_space<vmem>>, vector<128x128xbf16>
    %cst_20 = arith.constant dense<0.000000e+00> : vector<8x128xf32>
    %27 = tpu.matmul %25, %26, %cst_20 {dimension_numbers = #tpu.dot_dimension_numbers<[1], [0], [0], [1], [0, 0, 1, 1], [], []>} : vector<8x128xbf16>, vector<128x128xbf16>, vector<8x128xf32> -> vector<8x128xf32>
    %c0_21 = arith.constant 0 : index
    %c0_22 = arith.constant 0 : index
    %28 = vector.load %arg9[%c0_21, %c0_22] : memref<1x128xf32, #tpu.memory_space<vmem>>, vector<1x128xf32>
    %29 = vector.broadcast %28 : vector<1x128xf32> to vector<8x128xf32>
    %30 = arith.addf %27, %29 : vector<8x128xf32>
    %c0_23 = arith.constant 0 : index
    %c0_24 = arith.constant 0 : index
    %31 = vector.load %arg10[%c0_23, %c0_24] : memref<8x128xf32, #tpu.memory_space<vmem>>, vector<8x128xf32>
    tpu.vector_store %arg10[%c0_23, %c0_24], %30 {strides = array<i32>} : memref<8x128xf32, #tpu.memory_space<vmem>>, vector<8x128xf32>,
    return
  }
  func.func @transform_0(%arg0: i32) -> (i32, i32) {
    %c0_i32 = arith.constant 0 : i32
    %c0_i32_0 = arith.constant 0 : i32
    return %arg0, %c0_i32 : i32, i32
  }
  func.func @transform_1(%arg0: i32) -> (i32, i32) {
    %c0_i32 = arith.constant 0 : i32
    %c0_i32_0 = arith.constant 0 : i32
    %c0_i32_1 = arith.constant 0 : i32
    return %c0_i32, %c0_i32_0 : i32, i32
  }
  func.func @transform_2(%arg0: i32) -> (i32, i32) {
    %c0_i32 = arith.constant 0 : i32
    %c0_i32_0 = arith.constant 0 : i32
    %c0_i32_1 = arith.constant 0 : i32
    return %c0_i32, %c0_i32_0 : i32, i32
  }
  func.func @transform_3(%arg0: i32) -> (i32, i32) {
    %c0_i32 = arith.constant 0 : i32
    %c0_i32_0 = arith.constant 0 : i32
    %c0_i32_1 = arith.constant 0 : i32
    return %c0_i32, %c0_i32_0 : i32, i32
  }
  func.func @transform_4(%arg0: i32) -> (i32, i32) {
    %c0_i32 = arith.constant 0 : i32
    %c0_i32_0 = arith.constant 0 : i32
    %c0_i32_1 = arith.constant 0 : i32
    return %c0_i32, %c0_i32_0 : i32, i32
  }
  func.func @transform_5(%arg0: i32) -> (i32, i32) {
    %c0_i32 = arith.constant 0 : i32
    %c0_i32_0 = arith.constant 0 : i32
    %c0_i32_1 = arith.constant 0 : i32
    return %c0_i32, %c0_i32_0 : i32, i32
  }
  func.func @transform_6(%arg0: i32) -> (i32, i32) {
    %c0_i32 = arith.constant 0 : i32
    %c0_i32_0 = arith.constant 0 : i32
    %c0_i32_1 = arith.constant 0 : i32
    return %c0_i32, %c0_i32_0 : i32, i32
  }
  func.func @transform_7(%arg0: i32) -> (i32, i32) {
    %c0_i32 = arith.constant 0 : i32
    %c0_i32_0 = arith.constant 0 : i32
    %c0_i32_1 = arith.constant 0 : i32
    return %c0_i32, %c0_i32_0 : i32, i32
  }
  func.func @transform_8(%arg0: i32) -> (i32, i32) {
    %c0_i32 = arith.constant 0 : i32
    %c0_i32_0 = arith.constant 0 : i32
    %c0_i32_1 = arith.constant 0 : i32
    return %c0_i32, %c0_i32_0 : i32, i32
  }
  func.func @transform_9(%arg0: i32) -> (i32, i32) {
    %c0_i32 = arith.constant 0 : i32
    %c0_i32_0 = arith.constant 0 : i32
    return %arg0, %c0_i32 : i32, i32
  }
}

</mosaic_0001>

<llo_original>
// kernel: simple_mlp_forward.1
$region0: #{simple_mlp_forward.1}
  #allocation0 [shape = 'u32[]', space=smem, size = 0x4, offset = 0x4, fixed_abs, tag = 'smem constant byte address 0x4 - core index']
  #allocation1 [shape = 'u32[144,128]{1,0:T(1,128)}', space=vmem, size = 0x12000, scoped, tag = 'internal scratch']
  %s0 = inlined_call_operand.vmem [shape: f32[8,784], index: 0, kind: input, shape index: {}]
  %s1 = inlined_call_operand.hbm [shape: bf16[784,512], index: 1, kind: input, shape index: {}]
  %s2 = inlined_call_operand.vmem [shape: f32[1,512], index: 2, kind: input, shape index: {}]
  %s3 = inlined_call_operand.vmem [shape: bf16[512,256], index: 3, kind: input, shape index: {}]
  %s4 = inlined_call_operand.vmem [shape: f32[1,256], index: 4, kind: input, shape index: {}]
  %s5 = inlined_call_operand.vmem [shape: bf16[256,128], index: 5, kind: input, shape index: {}]
  %s6 = inlined_call_operand.vmem [shape: f32[1,128], index: 6, kind: input, shape index: {}]
  %s7 = inlined_call_operand.vmem [shape: bf16[128,128], index: 7, kind: input, shape index: {}]
  %s8 = inlined_call_operand.vmem [shape: f32[1,128], index: 8, kind: input, shape index: {}]
  %s9 = inlined_call_operand.hbm [shape: f32[8,128], index: 9, kind: output, shape index: {}]
  %s10 = sld [smem:[#allocation0]]
  $region50: #{simple_mlp_forward.1} parent=0
    _
  %s12 = ssub.s32 1, %s10
  %s13 = scalar_select 0, %s12, %s10
  $region1: #{simple_mlp_forward.1} parent=0
    #allocation2 [shape = 'u8[802816]{0}', space=vmem, size = 0xc4000, scoped, tag = 'input window, operand 1, single buffered']
    #allocation3 [shape = 's32[1]{0}', space=sflag, size = 0x4, scoped, tag = 'scoped memory for simple_mlp_forward.1']
    #allocation4 [shape = 's32[1]{0}', space=sflag, size = 0x4, scoped, tag = 'scoped memory for simple_mlp_forward.1']
    #allocation5 [shape = 'u8[4096]{0}', space=vmem, size = 0x1000, scoped, tag = 'output window, operand 0, single buffered']
    %14 = vsyncpa [#allocation3], 0
    %15 = vsyncpa [#allocation4], 0
    // Predicated region
    $region2: #{simple_mlp_forward.1} parent=1 // pred_check
      _
    $region3: #{simple_mlp_forward.1} parent=1 // pred_check_branch
      %17 = sbr.rel (0) target = $region5
    $region4: #{simple_mlp_forward.1} parent=1 // pred_region
      _
    $region5: #{simple_mlp_forward.1} parent=1 // pred_fallthru
      _
    // Predicated region
    $region6: #{simple_mlp_forward.1} parent=1 // pred_check
      _
    $region7: #{simple_mlp_forward.1} parent=1 // pred_check_branch
      %19 = sbr.rel (0) target = $region9
    $region8: #{simple_mlp_forward.1} parent=1 // pred_region
      %s21 = ssub.s32 25088, 25088
      %22 = vsyncadd [#allocation3], %s21
      %s23 = sshll.u32 [#allocation2], 4
      %s24 = int_to_ptr.vmem [resolvable:$true] %s23
      %29 = dma.hbm_to_vmem [thread:$0]  %s1, 25088, %s24, [#allocation3], 256, 256, 16
    $region9: #{simple_mlp_forward.1} parent=1 // pred_fallthru
      _
    // Predicated region
    $region10: #{simple_mlp_forward.1} parent=1 // pred_check
      _
    $region11: #{simple_mlp_forward.1} parent=1 // pred_check_branch
      %31 = sbr.rel (0) target = $region13
    $region12: #{simple_mlp_forward.1} parent=1 // pred_region
      _
    $region13: #{simple_mlp_forward.1} parent=1 // pred_fallthru
      _
    // Predicated region
    $region14: #{simple_mlp_forward.1} parent=1 // pred_check
      _
    $region15: #{simple_mlp_forward.1} parent=1 // pred_check_branch
      %33 = sbr.rel (0) target = $region17
    $region16: #{simple_mlp_forward.1} parent=1 // pred_region
      _
    $region17: #{simple_mlp_forward.1} parent=1 // pred_fallthru
      _
    // Predicated region
    $region18: #{simple_mlp_forward.1} parent=1 // pred_check
      _
    $region19: #{simple_mlp_forward.1} parent=1 // pred_check_branch
      %35 = sbr.rel (0) target = $region21
    $region20: #{simple_mlp_forward.1} parent=1 // pred_region
      _
    $region21: #{simple_mlp_forward.1} parent=1 // pred_fallthru
      _
    // Predicated region
    $region22: #{simple_mlp_forward.1} parent=1 // pred_check
      _
    $region23: #{simple_mlp_forward.1} parent=1 // pred_check_branch
      %37 = sbr.rel (0) target = $region25
    $region24: #{simple_mlp_forward.1} parent=1 // pred_region
      _
    $region25: #{simple_mlp_forward.1} parent=1 // pred_fallthru
      _
    // Predicated region
    $region26: #{simple_mlp_forward.1} parent=1 // pred_check
      _
    $region27: #{simple_mlp_forward.1} parent=1 // pred_check_branch
      %39 = sbr.rel (0) target = $region29
    $region28: #{simple_mlp_forward.1} parent=1 // pred_region
      _
    $region29: #{simple_mlp_forward.1} parent=1 // pred_fallthru
      _
    // Predicated region
    $region30: #{simple_mlp_forward.1} parent=1 // pred_check
      _
    $region31: #{simple_mlp_forward.1} parent=1 // pred_check_branch
      %41 = sbr.rel (0) target = $region33
    $region32: #{simple_mlp_forward.1} parent=1 // pred_region
      _
    $region33: #{simple_mlp_forward.1} parent=1 // pred_fallthru
      _
    // Predicated region
    $region34: #{simple_mlp_forward.1} parent=1 // pred_check
      _
    $region35: #{simple_mlp_forward.1} parent=1 // pred_check_branch
      %43 = sbr.rel (0) target = $region37
    $region36: #{simple_mlp_forward.1} parent=1 // pred_region
      _
    $region37: #{simple_mlp_forward.1} parent=1 // pred_fallthru
      _
    // Predicated region
    $region38: #{simple_mlp_forward.1} parent=1 // pred_check
      _
    $region39: #{simple_mlp_forward.1} parent=1 // pred_check_branch
      %45 = sbr.rel (0) target = $region41
    $region40: #{simple_mlp_forward.1} parent=1 // pred_region
      %46 = dma.done [#allocation3], 25088
    $region41: #{simple_mlp_forward.1} parent=1 // pred_fallthru
      _
    %v48 = vld [vmem:[%s0] sm:$0xff]
    %v49 = vld [vmem:[%s0 + $0x8] sm:$0xff]
    %v50 = vld [vmem:[%s0 + $0x10] sm:$0xff]
    %v51 = vld [vmem:[%s0 + $0x18] sm:$0xff]
    %v52 = vld [vmem:[%s0 + $0x20] sm:$0xff]
    %v53 = vld [vmem:[%s0 + $0x28] sm:$0xff]
    %v54 = vld [vmem:[%s0 + $0x30] sm:$0xff]
    %v55 = vpack.c.bf16 %v48, %v48
    %v56 = vpack.c.bf16 %v49, %v49
    %v57 = vpack.c.bf16 %v50, %v50
    %v58 = vpack.c.bf16 %v51, %v51
    %v59 = vpack.c.bf16 %v52, %v52
    %v60 = vpack.c.bf16 %v53, %v53
    %v61 = vpack.c.bf16 %v54, %v54
    %v62 = vld [vmem:[#allocation2] sm:$0xff]
    %v63 = vld [vmem:[#allocation2 + $0x8] sm:$0xff]
    %v64 = vld [vmem:[#allocation2 + $0x10] sm:$0xff]
    %v65 = vld [vmem:[#allocation2 + $0x18] sm:$0xff]
    %v66 = vld [vmem:[#allocation2 + $0x20] sm:$0xff]
    %v67 = vld [vmem:[#allocation2 + $0x28] sm:$0xff]
    %v68 = vld [vmem:[#allocation2 + $0x30] sm:$0xff]
    %v69 = vld [vmem:[#allocation2 + $0x38] sm:$0xff]
    %v70 = vld [vmem:[#allocation2 + $0x40] sm:$0xff]
    %v71 = vld [vmem:[#allocation2 + $0x48] sm:$0xff]
    %v72 = vld [vmem:[#allocation2 + $0x50] sm:$0xff]
    %v73 = vld [vmem:[#allocation2 + $0x58] sm:$0xff]
    %v74 = vld [vmem:[#allocation2 + $0x60] sm:$0xff]
    %v75 = vld [vmem:[#allocation2 + $0x68] sm:$0xff]
    %v76 = vld [vmem:[#allocation2 + $0x70] sm:$0xff]
    %v77 = vld [vmem:[#allocation2 + $0x78] sm:$0xff]
    %v78 = vld [vmem:[#allocation2 + $0x80] sm:$0xff]
    %v79 = vld [vmem:[#allocation2 + $0x88] sm:$0xff]
    %v80 = vld [vmem:[#allocation2 + $0x90] sm:$0xff]
    %v81 = vld [vmem:[#allocation2 + $0x98] sm:$0xff]
    %v82 = vld [vmem:[#allocation2 + $0xa0] sm:$0xff]
    %v83 = vld [vmem:[#allocation2 + $0xa8] sm:$0xff]
    %v84 = vld [vmem:[#allocation2 + $0xb0] sm:$0xff]
    %v85 = vld [vmem:[#allocation2 + $0xb8] sm:$0xff]
    %v86 = vld [vmem:[#allocation2 + $0xc0] sm:$0xff]
    %v87 = vld [vmem:[#allocation2 + $0xc8] sm:$0xff]
    %v88 = vld [vmem:[#allocation2 + $0xd0] sm:$0xff]
    %v89 = vld [vmem:[#allocation2 + $0xd8] sm:$0xff]
    %v90 = vld [vmem:[#allocation2 + $0xe0] sm:$0xff]
    %v91 = vld [vmem:[#allocation2 + $0xe8] sm:$0xff]
    %v92 = vld [vmem:[#allocation2 + $0xf0] sm:$0xff]
    %v93 = vld [vmem:[#allocation2 + $0xf8] sm:$0xff]
    %v94 = vld [vmem:[#allocation2 + $0x100] sm:$0xff]
    %v95 = vld [vmem:[#allocation2 + $0x108] sm:$0xff]
    %v96 = vld [vmem:[#allocation2 + $0x110] sm:$0xff]
    %v97 = vld [vmem:[#allocation2 + $0x118] sm:$0xff]
    %v98 = vld [vmem:[#allocation2 + $0x120] sm:$0xff]
    %v99 = vld [vmem:[#allocation2 + $0x128] sm:$0xff]
    %v100 = vld [vmem:[#allocation2 + $0x130] sm:$0xff]
    %v101 = vld [vmem:[#allocation2 + $0x138] sm:$0xff]
    %v102 = vld [vmem:[#allocation2 + $0x140] sm:$0xff]
    %v103 = vld [vmem:[#allocation2 + $0x148] sm:$0xff]
    %v104 = vld [vmem:[#allocation2 + $0x150] sm:$0xff]
    %v105 = vld [vmem:[#allocation2 + $0x158] sm:$0xff]
    %v106 = vld [vmem:[#allocation2 + $0x160] sm:$0xff]
    %v107 = vld [vmem:[#allocation2 + $0x168] sm:$0xff]
    %v108 = vld [vmem:[#allocation2 + $0x170] sm:$0xff]
    %v109 = vld [vmem:[#allocation2 + $0x178] sm:$0xff]
    %v110 = vld [vmem:[#allocation2 + $0x180] sm:$0xff]
    %v111 = vld [vmem:[#allocation2 + $0x188] sm:$0xff]
    %v112 = vld [vmem:[#allocation2 + $0x190] sm:$0xff]
    %v113 = vld [vmem:[#allocation2 + $0x198] sm:$0xff]
    %v114 = vld [vmem:[#allocation2 + $0x1a0] sm:$0xff]
    %v115 = vld [vmem:[#allocation2 + $0x1a8] sm:$0xff]
    %v116 = vld [vmem:[#allocation2 + $0x1b0] sm:$0xff]
    %v117 = vld [vmem:[#allocation2 + $0x1b8] sm:$0xff]
    %v118 = vld [vmem:[#allocation2 + $0x1c0] sm:$0xff]
    %v119 = vld [vmem:[#allocation2 + $0x1c8] sm:$0xff]
    %v120 = vld [vmem:[#allocation2 + $0x1d0] sm:$0xff]
    %v121 = vld [vmem:[#allocation2 + $0x1d8] sm:$0xff]
    %v122 = vld [vmem:[#allocation2 + $0x1e0] sm:$0xff]
    %v123 = vld [vmem:[#allocation2 + $0x1e8] sm:$0xff]
    %v124 = vld [vmem:[#allocation2 + $0x1f0] sm:$0xff]
    %v125 = vld [vmem:[#allocation2 + $0x1f8] sm:$0xff]
    %v126 = vld [vmem:[#allocation2 + $0x200] sm:$0xff]
    %v127 = vld [vmem:[#allocation2 + $0x208] sm:$0xff]
    %v128 = vld [vmem:[#allocation2 + $0x210] sm:$0xff]
    %v129 = vld [vmem:[#allocation2 + $0x218] sm:$0xff]
    %v130 = vld [vmem:[#allocation2 + $0x220] sm:$0xff]
    %v131 = vld [vmem:[#allocation2 + $0x228] sm:$0xff]
    %v132 = vld [vmem:[#allocation2 + $0x230] sm:$0xff]
    %v133 = vld [vmem:[#allocation2 + $0x238] sm:$0xff]
    %v134 = vld [vmem:[#allocation2 + $0x240] sm:$0xff]
    %v135 = vld [vmem:[#allocation2 + $0x248] sm:$0xff]
    %v136 = vld [vmem:[#allocation2 + $0x250] sm:$0xff]
    %v137 = vld [vmem:[#allocation2 + $0x258] sm:$0xff]
    %v138 = vld [vmem:[#allocation2 + $0x260] sm:$0xff]
    %v139 = vld [vmem:[#allocation2 + $0x268] sm:$0xff]
    %v140 = vld [vmem:[#allocation2 + $0x270] sm:$0xff]
    %v141 = vld [vmem:[#allocation2 + $0x278] sm:$0xff]
    %v142 = vld [vmem:[#allocation2 + $0x280] sm:$0xff]
    %v143 = vld [vmem:[#allocation2 + $0x288] sm:$0xff]
    %v144 = vld [vmem:[#allocation2 + $0x290] sm:$0xff]
    %v145 = vld [vmem:[#allocation2 + $0x298] sm:$0xff]
    %v146 = vld [vmem:[#allocation2 + $0x2a0] sm:$0xff]
    %v147 = vld [vmem:[#allocation2 + $0x2a8] sm:$0xff]
    %v148 = vld [vmem:[#allocation2 + $0x2b0] sm:$0xff]
    %v149 = vld [vmem:[#allocation2 + $0x2b8] sm:$0xff]
    %v150 = vld [vmem:[#allocation2 + $0x2c0] sm:$0xff]
    %v151 = vld [vmem:[#allocation2 + $0x2c8] sm:$0xff]
    %v152 = vld [vmem:[#allocation2 + $0x2d0] sm:$0xff]
    %v153 = vld [vmem:[#allocation2 + $0x2d8] sm:$0xff]
    %v154 = vld [vmem:[#allocation2 + $0x2e0] sm:$0xff]
    %v155 = vld [vmem:[#allocation2 + $0x2e8] sm:$0xff]
    %v156 = vld [vmem:[#allocation2 + $0x2f0] sm:$0xff]
    %v157 = vld [vmem:[#allocation2 + $0x2f8] sm:$0xff]
    %v158 = vld [vmem:[#allocation2 + $0x300] sm:$0xff]
    %v159 = vld [vmem:[#allocation2 + $0x308] sm:$0xff]
    %v160 = vld [vmem:[#allocation2 + $0x310] sm:$0xff]
    %v161 = vld [vmem:[#allocation2 + $0x318] sm:$0xff]
    %v162 = vld [vmem:[#allocation2 + $0x320] sm:$0xff]
    %v163 = vld [vmem:[#allocation2 + $0x328] sm:$0xff]
    %v164 = vld [vmem:[#allocation2 + $0x330] sm:$0xff]
    %v165 = vld [vmem:[#allocation2 + $0x338] sm:$0xff]
    %v166 = vld [vmem:[#allocation2 + $0x340] sm:$0xff]
    %v167 = vld [vmem:[#allocation2 + $0x348] sm:$0xff]
    %v168 = vld [vmem:[#allocation2 + $0x350] sm:$0xff]
    %v169 = vld [vmem:[#allocation2 + $0x358] sm:$0xff]
    %v170 = vld [vmem:[#allocation2 + $0x360] sm:$0xff]
    %v171 = vld [vmem:[#allocation2 + $0x368] sm:$0xff]
    %v172 = vld [vmem:[#allocation2 + $0x370] sm:$0xff]
    %v173 = vld [vmem:[#allocation2 + $0x378] sm:$0xff]
    %v174 = vld [vmem:[#allocation2 + $0x380] sm:$0xff]
    %v175 = vld [vmem:[#allocation2 + $0x388] sm:$0xff]
    %v176 = vld [vmem:[#allocation2 + $0x390] sm:$0xff]
    %v177 = vld [vmem:[#allocation2 + $0x398] sm:$0xff]
    %v178 = vld [vmem:[#allocation2 + $0x3a0] sm:$0xff]
    %v179 = vld [vmem:[#allocation2 + $0x3a8] sm:$0xff]
    %v180 = vld [vmem:[#allocation2 + $0x3b0] sm:$0xff]
    %v181 = vld [vmem:[#allocation2 + $0x3b8] sm:$0xff]
    %v182 = vld [vmem:[#allocation2 + $0x3c0] sm:$0xff]
    %v183 = vld [vmem:[#allocation2 + $0x3c8] sm:$0xff]
    %v184 = vld [vmem:[#allocation2 + $0x3d0] sm:$0xff]
    %v185 = vld [vmem:[#allocation2 + $0x3d8] sm:$0xff]
    %v186 = vld [vmem:[#allocation2 + $0x3e0] sm:$0xff]
    %v187 = vld [vmem:[#allocation2 + $0x3e8] sm:$0xff]
    %v188 = vld [vmem:[#allocation2 + $0x3f0] sm:$0xff]
    %v189 = vld [vmem:[#allocation2 + $0x3f8] sm:$0xff]
    %v190 = vld [vmem:[#allocation2 + $0x400] sm:$0xff]
    %v191 = vld [vmem:[#allocation2 + $0x408] sm:$0xff]
    %v192 = vld [vmem:[#allocation2 + $0x410] sm:$0xff]
    %v193 = vld [vmem:[#allocation2 + $0x418] sm:$0xff]
    %v194 = vld [vmem:[#allocation2 + $0x420] sm:$0xff]
    %v195 = vld [vmem:[#allocation2 + $0x428] sm:$0xff]
    %v196 = vld [vmem:[#allocation2 + $0x430] sm:$0xff]
    %v197 = vld [vmem:[#allocation2 + $0x438] sm:$0xff]
    %v198 = vld [vmem:[#allocation2 + $0x440] sm:$0xff]
    %v199 = vld [vmem:[#allocation2 + $0x448] sm:$0xff]
    %v200 = vld [vmem:[#allocation2 + $0x450] sm:$0xff]
    %v201 = vld [vmem:[#allocation2 + $0x458] sm:$0xff]
    %v202 = vld [vmem:[#allocation2 + $0x460] sm:$0xff]
    %v203 = vld [vmem:[#allocation2 + $0x468] sm:$0xff]
    %v204 = vld [vmem:[#allocation2 + $0x470] sm:$0xff]
    %v205 = vld [vmem:[#allocation2 + $0x478] sm:$0xff]
    %v206 = vld [vmem:[#allocation2 + $0x480] sm:$0xff]
    %v207 = vld [vmem:[#allocation2 + $0x488] sm:$0xff]
    %v208 = vld [vmem:[#allocation2 + $0x490] sm:$0xff]
    %v209 = vld [vmem:[#allocation2 + $0x498] sm:$0xff]
    %v210 = vld [vmem:[#allocation2 + $0x4a0] sm:$0xff]
    %v211 = vld [vmem:[#allocation2 + $0x4a8] sm:$0xff]
    %v212 = vld [vmem:[#allocation2 + $0x4b0] sm:$0xff]
    %v213 = vld [vmem:[#allocation2 + $0x4b8] sm:$0xff]
    %v214 = vld [vmem:[#allocation2 + $0x4c0] sm:$0xff]
    %v215 = vld [vmem:[#allocation2 + $0x4c8] sm:$0xff]
    %v216 = vld [vmem:[#allocation2 + $0x4d0] sm:$0xff]
    %v217 = vld [vmem:[#allocation2 + $0x4d8] sm:$0xff]
    %v218 = vld [vmem:[#allocation2 + $0x4e0] sm:$0xff]
    %v219 = vld [vmem:[#allocation2 + $0x4e8] sm:$0xff]
    %v220 = vld [vmem:[#allocation2 + $0x4f0] sm:$0xff]
    %v221 = vld [vmem:[#allocation2 + $0x4f8] sm:$0xff]
    %v222 = vld [vmem:[#allocation2 + $0x500] sm:$0xff]
    %v223 = vld [vmem:[#allocation2 + $0x508] sm:$0xff]
    %v224 = vld [vmem:[#allocation2 + $0x510] sm:$0xff]
    %v225 = vld [vmem:[#allocation2 + $0x518] sm:$0xff]
    %v226 = vld [vmem:[#allocation2 + $0x520] sm:$0xff]
    %v227 = vld [vmem:[#allocation2 + $0x528] sm:$0xff]
    %v228 = vld [vmem:[#allocation2 + $0x530] sm:$0xff]
    %v229 = vld [vmem:[#allocation2 + $0x538] sm:$0xff]
    %v230 = vld [vmem:[#allocation2 + $0x540] sm:$0xff]
    %v231 = vld [vmem:[#allocation2 + $0x548] sm:$0xff]
    %v232 = vld [vmem:[#allocation2 + $0x550] sm:$0xff]
    %v233 = vld [vmem:[#allocation2 + $0x558] sm:$0xff]
    %v234 = vld [vmem:[#allocation2 + $0x560] sm:$0xff]
    %v235 = vld [vmem:[#allocation2 + $0x568] sm:$0xff]
    %v236 = vld [vmem:[#allocation2 + $0x570] sm:$0xff]
    %v237 = vld [vmem:[#allocation2 + $0x578] sm:$0xff]
    %v238 = vld [vmem:[#allocation2 + $0x580] sm:$0xff]
    %v239 = vld [vmem:[#allocation2 + $0x588] sm:$0xff]
    %v240 = vld [vmem:[#allocation2 + $0x590] sm:$0xff]
    %v241 = vld [vmem:[#allocation2 + $0x598] sm:$0xff]
    %v242 = vld [vmem:[#allocation2 + $0x5a0] sm:$0xff]
    %v243 = vld [vmem:[#allocation2 + $0x5a8] sm:$0xff]
    %v244 = vld [vmem:[#allocation2 + $0x5b0] sm:$0xff]
    %v245 = vld [vmem:[#allocation2 + $0x5b8] sm:$0xff]
    %v246 = vld [vmem:[#allocation2 + $0x5c0] sm:$0xff]
    %v247 = vld [vmem:[#allocation2 + $0x5c8] sm:$0xff]
    %v248 = vld [vmem:[#allocation2 + $0x5d0] sm:$0xff]
    %v249 = vld [vmem:[#allocation2 + $0x5d8] sm:$0xff]
    %v250 = vld [vmem:[#allocation2 + $0x5e0] sm:$0xff]
    %v251 = vld [vmem:[#allocation2 + $0x5e8] sm:$0xff]
    %v252 = vld [vmem:[#allocation2 + $0x5f0] sm:$0xff]
    %v253 = vld [vmem:[#allocation2 + $0x5f8] sm:$0xff]
    %v254 = vld [vmem:[#allocation2 + $0x600] sm:$0xff]
    %v255 = vld [vmem:[#allocation2 + $0x608] sm:$0xff]
    %v256 = vld [vmem:[#allocation2 + $0x610] sm:$0xff]
    %v257 = vld [vmem:[#allocation2 + $0x618] sm:$0xff]
    %v258 = vld [vmem:[%s2] sm:$0xf]
    %v260 = vlaneseq
    %v261 = vshrl.u32 %v260, 7
    %v262 = vsub.s32 0, %v261
    %v263 = vrot.slane %v258, %v262
    %v264 = vlaneseq
    %v265 = vshrl.u32 %v264, 7
    %v266 = vsub.s32 1, %v265
    %v267 = vrot.slane %v258, %v266
    %v268 = vlaneseq
    %v269 = vshrl.u32 %v268, 7
    %v270 = vsub.s32 2, %v269
    %v271 = vrot.slane %v258, %v270
    %v272 = vlaneseq
    %v273 = vshrl.u32 %v272, 7
    %v274 = vsub.s32 3, %v273
    %v275 = vrot.slane %v258, %v274
    %v476 = vunpack.c.l.b16 %v62
    %v477 = vunpack.c.h.b16 %v62
    %v478 = vunpack.c.l.b16 %v63
    %v479 = vunpack.c.h.b16 %v63
    %v480 = vunpack.c.l.b16 %v64
    %v481 = vunpack.c.h.b16 %v64
    %v482 = vunpack.c.l.b16 %v65
    %v483 = vunpack.c.h.b16 %v65
    %v484 = vunpack.c.l.b16 %v66
    %v485 = vunpack.c.h.b16 %v66
    %v486 = vunpack.c.l.b16 %v67
    %v487 = vunpack.c.h.b16 %v67
    %v488 = vunpack.c.l.b16 %v68
    %v489 = vunpack.c.h.b16 %v68
    %v490 = vunpack.c.l.b16 %v69
    %v491 = vunpack.c.h.b16 %v69
    %v492 = vunpack.c.l.b16 %v70
    %v493 = vunpack.c.h.b16 %v70
    %v494 = vunpack.c.l.b16 %v71
    %v495 = vunpack.c.h.b16 %v71
    %v496 = vunpack.c.l.b16 %v72
    %v497 = vunpack.c.h.b16 %v72
    %v498 = vunpack.c.l.b16 %v73
    %v499 = vunpack.c.h.b16 %v73
    %v500 = vunpack.c.l.b16 %v74
    %v501 = vunpack.c.h.b16 %v74
    %v502 = vunpack.c.l.b16 %v75
    %v503 = vunpack.c.h.b16 %v75
    %v504 = vunpack.c.l.b16 %v76
    %v505 = vunpack.c.h.b16 %v76
    %v506 = vunpack.c.l.b16 %v77
    %v507 = vunpack.c.h.b16 %v77
    %v508 = vunpack.c.l.b16 %v78
    %v509 = vunpack.c.h.b16 %v78
    %v510 = vunpack.c.l.b16 %v79
    %v511 = vunpack.c.h.b16 %v79
    %v512 = vunpack.c.l.b16 %v80
    %v513 = vunpack.c.h.b16 %v80
    %v514 = vunpack.c.l.b16 %v81
    %v515 = vunpack.c.h.b16 %v81
    %v516 = vunpack.c.l.b16 %v82
    %v517 = vunpack.c.h.b16 %v82
    %v518 = vunpack.c.l.b16 %v83
    %v519 = vunpack.c.h.b16 %v83
    %v520 = vunpack.c.l.b16 %v84
    %v521 = vunpack.c.h.b16 %v84
    %v522 = vunpack.c.l.b16 %v85
    %v523 = vunpack.c.h.b16 %v85
    %v524 = vunpack.c.l.b16 %v86
    %v525 = vunpack.c.h.b16 %v86
    %v526 = vunpack.c.l.b16 %v87
    %v527 = vunpack.c.h.b16 %v87
    %v528 = vunpack.c.l.b16 %v88
    %v529 = vunpack.c.h.b16 %v88
    %v530 = vunpack.c.l.b16 %v89
    %v531 = vunpack.c.h.b16 %v89
    %v532 = vunpack.c.l.b16 %v90
    %v533 = vunpack.c.h.b16 %v90
    %v534 = vunpack.c.l.b16 %v91
    %v535 = vunpack.c.h.b16 %v91
    %v536 = vunpack.c.l.b16 %v92
    %v537 = vunpack.c.h.b16 %v92
    %v538 = vunpack.c.l.b16 %v93
    %v539 = vunpack.c.h.b16 %v93
    %v540 = vunpack.c.l.b16 %v94
    %v541 = vunpack.c.h.b16 %v94
    %v542 = vunpack.c.l.b16 %v95
    %v543 = vunpack.c.h.b16 %v95
    %v544 = vunpack.c.l.b16 %v96
    %v545 = vunpack.c.h.b16 %v96
    %v546 = vunpack.c.l.b16 %v97
    %v547 = vunpack.c.h.b16 %v97
    %v548 = vunpack.c.l.b16 %v98
    %v549 = vunpack.c.h.b16 %v98
    %v550 = vunpack.c.l.b16 %v99
    %v551 = vunpack.c.h.b16 %v99
    %v552 = vunpack.c.l.b16 %v100
    %v553 = vunpack.c.h.b16 %v100
    %v554 = vunpack.c.l.b16 %v101
    %v555 = vunpack.c.h.b16 %v101
    %v556 = vunpack.c.l.b16 %v102
    %v557 = vunpack.c.h.b16 %v102
    %v558 = vunpack.c.l.b16 %v103
    %v559 = vunpack.c.h.b16 %v103
    %v560 = vunpack.c.l.b16 %v104
    %v561 = vunpack.c.h.b16 %v104
    %v562 = vunpack.c.l.b16 %v105
    %v563 = vunpack.c.h.b16 %v105
    %v564 = vunpack.c.l.b16 %v106
    %v565 = vunpack.c.h.b16 %v106
    %v566 = vunpack.c.l.b16 %v107
    %v567 = vunpack.c.h.b16 %v107
    %v568 = vunpack.c.l.b16 %v108
    %v569 = vunpack.c.h.b16 %v108
    %v570 = vunpack.c.l.b16 %v109
    %v571 = vunpack.c.h.b16 %v109
    %v572 = vunpack.c.l.b16 %v110
    %v573 = vunpack.c.h.b16 %v110
    %v574 = vunpack.c.l.b16 %v111
    %v575 = vunpack.c.h.b16 %v111
    %v576 = vunpack.c.l.b16 %v112
    %v577 = vunpack.c.h.b16 %v112
    %v578 = vunpack.c.l.b16 %v113
    %v579 = vunpack.c.h.b16 %v113
    %v580 = vunpack.c.l.b16 %v114
    %v581 = vunpack.c.h.b16 %v114
    %v582 = vunpack.c.l.b16 %v115
    %v583 = vunpack.c.h.b16 %v115
    %v584 = vunpack.c.l.b16 %v116
    %v585 = vunpack.c.h.b16 %v116
    %v586 = vunpack.c.l.b16 %v117
    %v587 = vunpack.c.h.b16 %v117
    %v588 = vunpack.c.l.b16 %v118
    %v589 = vunpack.c.h.b16 %v118
    %v590 = vunpack.c.l.b16 %v119
    %v591 = vunpack.c.h.b16 %v119
    %v592 = vunpack.c.l.b16 %v120
    %v593 = vunpack.c.h.b16 %v120
    %v594 = vunpack.c.l.b16 %v121
    %v595 = vunpack.c.h.b16 %v121
    %v596 = vunpack.c.l.b16 %v122
    %v597 = vunpack.c.h.b16 %v122
    %v598 = vunpack.c.l.b16 %v123
    %v599 = vunpack.c.h.b16 %v123
    %v600 = vunpack.c.l.b16 %v124
    %v601 = vunpack.c.h.b16 %v124
    %v602 = vunpack.c.l.b16 %v125
    %v603 = vunpack.c.h.b16 %v125
    %v604 = vunpack.c.l.b16 %v126
    %v605 = vunpack.c.h.b16 %v126
    %v606 = vunpack.c.l.b16 %v127
    %v607 = vunpack.c.h.b16 %v127
    %v608 = vunpack.c.l.b16 %v128
    %v609 = vunpack.c.h.b16 %v128
    %v610 = vunpack.c.l.b16 %v129
    %v611 = vunpack.c.h.b16 %v129
    %v612 = vunpack.c.l.b16 %v130
    %v613 = vunpack.c.h.b16 %v130
    %v614 = vunpack.c.l.b16 %v131
    %v615 = vunpack.c.h.b16 %v131
    %v616 = vunpack.c.l.b16 %v132
    %v617 = vunpack.c.h.b16 %v132
    %v618 = vunpack.c.l.b16 %v133
    %v619 = vunpack.c.h.b16 %v133
    %v620 = vunpack.c.l.b16 %v134
    %v621 = vunpack.c.h.b16 %v134
    %v622 = vunpack.c.l.b16 %v135
    %v623 = vunpack.c.h.b16 %v135
    %v624 = vunpack.c.l.b16 %v136
    %v625 = vunpack.c.h.b16 %v136
    %v626 = vunpack.c.l.b16 %v137
    %v627 = vunpack.c.h.b16 %v137
    %v628 = vunpack.c.l.b16 %v138
    %v629 = vunpack.c.h.b16 %v138
    %v630 = vunpack.c.l.b16 %v139
    %v631 = vunpack.c.h.b16 %v139
    %v632 = vunpack.c.l.b16 %v140
    %v633 = vunpack.c.h.b16 %v140
    %v634 = vunpack.c.l.b16 %v141
    %v635 = vunpack.c.h.b16 %v141
    %v636 = vunpack.c.l.b16 %v142
    %v637 = vunpack.c.h.b16 %v142
    %v638 = vunpack.c.l.b16 %v143
    %v639 = vunpack.c.h.b16 %v143
    %v640 = vunpack.c.l.b16 %v144
    %v641 = vunpack.c.h.b16 %v144
    %v642 = vunpack.c.l.b16 %v145
    %v643 = vunpack.c.h.b16 %v145
    %v644 = vunpack.c.l.b16 %v146
    %v645 = vunpack.c.h.b16 %v146
    %v646 = vunpack.c.l.b16 %v147
    %v647 = vunpack.c.h.b16 %v147
    %v648 = vunpack.c.l.b16 %v148
    %v649 = vunpack.c.h.b16 %v148
    %v650 = vunpack.c.l.b16 %v149
    %v651 = vunpack.c.h.b16 %v149
    %v652 = vunpack.c.l.b16 %v150
    %v653 = vunpack.c.h.b16 %v150
    %v654 = vunpack.c.l.b16 %v151
    %v655 = vunpack.c.h.b16 %v151
    %v656 = vunpack.c.l.b16 %v152
    %v657 = vunpack.c.h.b16 %v152
    %v658 = vunpack.c.l.b16 %v153
    %v659 = vunpack.c.h.b16 %v153
    %v660 = vunpack.c.l.b16 %v154
    %v661 = vunpack.c.h.b16 %v154
    %v662 = vunpack.c.l.b16 %v155
    %v663 = vunpack.c.h.b16 %v155
    %v664 = vunpack.c.l.b16 %v156
    %v665 = vunpack.c.h.b16 %v156
    %v666 = vunpack.c.l.b16 %v157
    %v667 = vunpack.c.h.b16 %v157
    %v668 = vunpack.c.l.b16 %v158
    %v669 = vunpack.c.h.b16 %v158
    %v670 = vunpack.c.l.b16 %v159
    %v671 = vunpack.c.h.b16 %v159
    %v672 = vunpack.c.l.b16 %v160
    %v673 = vunpack.c.h.b16 %v160
    %v674 = vunpack.c.l.b16 %v161
    %v675 = vunpack.c.h.b16 %v161
    %v676 = vunpack.c.l.b16 %v162
    %v677 = vunpack.c.h.b16 %v162
    %v678 = vunpack.c.l.b16 %v163
    %v679 = vunpack.c.h.b16 %v163
    %v680 = vunpack.c.l.b16 %v164
    %v681 = vunpack.c.h.b16 %v164
    %v682 = vunpack.c.l.b16 %v165
    %v683 = vunpack.c.h.b16 %v165
    %v684 = vunpack.c.l.b16 %v166
    %v685 = vunpack.c.h.b16 %v166
    %v686 = vunpack.c.l.b16 %v167
    %v687 = vunpack.c.h.b16 %v167
    %v688 = vunpack.c.l.b16 %v168
    %v689 = vunpack.c.h.b16 %v168
    %v690 = vunpack.c.l.b16 %v169
    %v691 = vunpack.c.h.b16 %v169
    %v692 = vunpack.c.l.b16 %v170
    %v693 = vunpack.c.h.b16 %v170
    %v694 = vunpack.c.l.b16 %v171
    %v695 = vunpack.c.h.b16 %v171
    %v696 = vunpack.c.l.b16 %v172
    %v697 = vunpack.c.h.b16 %v172
    %v698 = vunpack.c.l.b16 %v173
    %v699 = vunpack.c.h.b16 %v173
    %v700 = vunpack.c.l.b16 %v174
    %v701 = vunpack.c.h.b16 %v174
    %v702 = vunpack.c.l.b16 %v175
    %v703 = vunpack.c.h.b16 %v175
    %v704 = vunpack.c.l.b16 %v176
    %v705 = vunpack.c.h.b16 %v176
    %v706 = vunpack.c.l.b16 %v177
    %v707 = vunpack.c.h.b16 %v177
    %v708 = vunpack.c.l.b16 %v178
    %v709 = vunpack.c.h.b16 %v178
    %v710 = vunpack.c.l.b16 %v179
    %v711 = vunpack.c.h.b16 %v179
    %v712 = vunpack.c.l.b16 %v180
    %v713 = vunpack.c.h.b16 %v180
    %v714 = vunpack.c.l.b16 %v181
    %v715 = vunpack.c.h.b16 %v181
    %v716 = vunpack.c.l.b16 %v182
    %v717 = vunpack.c.h.b16 %v182
    %v718 = vunpack.c.l.b16 %v183
    %v719 = vunpack.c.h.b16 %v183
    %v720 = vunpack.c.l.b16 %v184
    %v721 = vunpack.c.h.b16 %v184
    %v722 = vunpack.c.l.b16 %v185
    %v723 = vunpack.c.h.b16 %v185
    %v724 = vunpack.c.l.b16 %v186
    %v725 = vunpack.c.h.b16 %v186
    %v726 = vunpack.c.l.b16 %v187
    %v727 = vunpack.c.h.b16 %v187
    %v728 = vunpack.c.l.b16 %v188
    %v729 = vunpack.c.h.b16 %v188
    %v730 = vunpack.c.l.b16 %v189
    %v731 = vunpack.c.h.b16 %v189
    %v732 = vunpack.c.l.b16 %v190
    %v733 = vunpack.c.h.b16 %v190
    %v734 = vunpack.c.l.b16 %v191
    %v735 = vunpack.c.h.b16 %v191
    %v736 = vunpack.c.l.b16 %v192
    %v737 = vunpack.c.h.b16 %v192
    %v738 = vunpack.c.l.b16 %v193
    %v739 = vunpack.c.h.b16 %v193
    %v740 = vunpack.c.l.b16 %v194
    %v741 = vunpack.c.h.b16 %v194
    %v742 = vunpack.c.l.b16 %v195
    %v743 = vunpack.c.h.b16 %v195
    %v744 = vunpack.c.l.b16 %v196
    %v745 = vunpack.c.h.b16 %v196
    %v746 = vunpack.c.l.b16 %v197
    %v747 = vunpack.c.h.b16 %v197
    %v748 = vunpack.c.l.b16 %v198
    %v749 = vunpack.c.h.b16 %v198
    %v750 = vunpack.c.l.b16 %v199
    %v751 = vunpack.c.h.b16 %v199
    %v752 = vunpack.c.l.b16 %v200
    %v753 = vunpack.c.h.b16 %v200
    %v754 = vunpack.c.l.b16 %v201
    %v755 = vunpack.c.h.b16 %v201
    %v756 = vunpack.c.l.b16 %v202
    %v757 = vunpack.c.h.b16 %v202
    %v758 = vunpack.c.l.b16 %v203
    %v759 = vunpack.c.h.b16 %v203
    %v760 = vunpack.c.l.b16 %v204
    %v761 = vunpack.c.h.b16 %v204
    %v762 = vunpack.c.l.b16 %v205
    %v763 = vunpack.c.h.b16 %v205
    %v764 = vunpack.c.l.b16 %v206
    %v765 = vunpack.c.h.b16 %v206
    %v766 = vunpack.c.l.b16 %v207
    %v767 = vunpack.c.h.b16 %v207
    %v768 = vunpack.c.l.b16 %v208
    %v769 = vunpack.c.h.b16 %v208
    %v770 = vunpack.c.l.b16 %v209
    %v771 = vunpack.c.h.b16 %v209
    %v772 = vunpack.c.l.b16 %v210
    %v773 = vunpack.c.h.b16 %v210
    %v774 = vunpack.c.l.b16 %v211
    %v775 = vunpack.c.h.b16 %v211
    %v776 = vunpack.c.l.b16 %v212
    %v777 = vunpack.c.h.b16 %v212
    %v778 = vunpack.c.l.b16 %v213
    %v779 = vunpack.c.h.b16 %v213
    %v780 = vunpack.c.l.b16 %v214
    %v781 = vunpack.c.h.b16 %v214
    %v782 = vunpack.c.l.b16 %v215
    %v783 = vunpack.c.h.b16 %v215
    %v784 = vunpack.c.l.b16 %v216
    %v785 = vunpack.c.h.b16 %v216
    %v786 = vunpack.c.l.b16 %v217
    %v787 = vunpack.c.h.b16 %v217
    %v788 = vunpack.c.l.b16 %v218
    %v789 = vunpack.c.h.b16 %v218
    %v790 = vunpack.c.l.b16 %v219
    %v791 = vunpack.c.h.b16 %v219
    %v792 = vunpack.c.l.b16 %v220
    %v793 = vunpack.c.h.b16 %v220
    %v794 = vunpack.c.l.b16 %v221
    %v795 = vunpack.c.h.b16 %v221
    %v796 = vunpack.c.l.b16 %v222
    %v797 = vunpack.c.h.b16 %v222
    %v798 = vunpack.c.l.b16 %v223
    %v799 = vunpack.c.h.b16 %v223
    %v800 = vunpack.c.l.b16 %v224
    %v801 = vunpack.c.h.b16 %v224
    %v802 = vunpack.c.l.b16 %v225
    %v803 = vunpack.c.h.b16 %v225
    %v804 = vunpack.c.l.b16 %v226
    %v805 = vunpack.c.h.b16 %v226
    %v806 = vunpack.c.l.b16 %v227
    %v807 = vunpack.c.h.b16 %v227
    %v808 = vunpack.c.l.b16 %v228
    %v809 = vunpack.c.h.b16 %v228
    %v810 = vunpack.c.l.b16 %v229
    %v811 = vunpack.c.h.b16 %v229
    %v812 = vunpack.c.l.b16 %v230
    %v813 = vunpack.c.h.b16 %v230
    %v814 = vunpack.c.l.b16 %v231
    %v815 = vunpack.c.h.b16 %v231
    %v816 = vunpack.c.l.b16 %v232
    %v817 = vunpack.c.h.b16 %v232
    %v818 = vunpack.c.l.b16 %v233
    %v819 = vunpack.c.h.b16 %v233
    %v820 = vunpack.c.l.b16 %v234
    %v821 = vunpack.c.h.b16 %v234
    %v822 = vunpack.c.l.b16 %v235
    %v823 = vunpack.c.h.b16 %v235
    %v824 = vunpack.c.l.b16 %v236
    %v825 = vunpack.c.h.b16 %v236
    %v826 = vunpack.c.l.b16 %v237
    %v827 = vunpack.c.h.b16 %v237
    %v828 = vunpack.c.l.b16 %v238
    %v829 = vunpack.c.h.b16 %v238
    %v830 = vunpack.c.l.b16 %v239
    %v831 = vunpack.c.h.b16 %v239
    %v832 = vunpack.c.l.b16 %v240
    %v833 = vunpack.c.h.b16 %v240
    %v834 = vunpack.c.l.b16 %v241
    %v835 = vunpack.c.h.b16 %v241
    %v836 = vunpack.c.l.b16 %v242
    %v837 = vunpack.c.h.b16 %v242
    %v838 = vunpack.c.l.b16 %v243
    %v839 = vunpack.c.h.b16 %v243
    %v840 = vunpack.c.l.b16 %v244
    %v841 = vunpack.c.h.b16 %v244
    %v842 = vunpack.c.l.b16 %v245
    %v843 = vunpack.c.h.b16 %v245
    %v844 = vunpack.c.l.b16 %v246
    %v845 = vunpack.c.h.b16 %v246
    %v846 = vunpack.c.l.b16 %v247
    %v847 = vunpack.c.h.b16 %v247
    %v848 = vunpack.c.l.b16 %v248
    %v849 = vunpack.c.h.b16 %v248
    %v850 = vunpack.c.l.b16 %v249
    %v851 = vunpack.c.h.b16 %v249
    %v852 = vunpack.c.l.b16 %v250
    %v853 = vunpack.c.h.b16 %v250
    %v854 = vunpack.c.l.b16 %v251
    %v855 = vunpack.c.h.b16 %v251
    %v856 = vunpack.c.l.b16 %v252
    %v857 = vunpack.c.h.b16 %v252
    %v858 = vunpack.c.l.b16 %v253
    %v859 = vunpack.c.h.b16 %v253
    %v860 = vunpack.c.l.b16 %v254
    %v861 = vunpack.c.h.b16 %v254
    %v862 = vunpack.c.l.b16 %v255
    %v863 = vunpack.c.h.b16 %v255
    %v864 = vunpack.c.l.b16 %v256
    %v865 = vunpack.c.h.b16 %v256
    %v866 = vunpack.c.l.b16 %v257
    %v867 = vunpack.c.h.b16 %v257
    %v868 = vpack.c.b16 %v480, %v476
    %v869 = vpack.c.b16 %v481, %v477
    %v870 = vpack.c.b16 %v482, %v478
    %v871 = vpack.c.b16 %v483, %v479
    %v872 = vpack.c.b16 %v488, %v484
    %v873 = vpack.c.b16 %v489, %v485
    %v874 = vpack.c.b16 %v490, %v486
    %v875 = vpack.c.b16 %v491, %v487
    %v876 = vpack.c.b16 %v496, %v492
    %v877 = vpack.c.b16 %v497, %v493
    %v878 = vpack.c.b16 %v498, %v494
    %v879 = vpack.c.b16 %v499, %v495
    %v880 = vpack.c.b16 %v504, %v500
    %v881 = vpack.c.b16 %v505, %v501
    %v882 = vpack.c.b16 %v506, %v502
    %v883 = vpack.c.b16 %v507, %v503
    %v884 = vpack.c.b16 %v512, %v508
    %v885 = vpack.c.b16 %v513, %v509
    %v886 = vpack.c.b16 %v514, %v510
    %v887 = vpack.c.b16 %v515, %v511
    %v888 = vpack.c.b16 %v520, %v516
    %v889 = vpack.c.b16 %v521, %v517
    %v890 = vpack.c.b16 %v522, %v518
    %v891 = vpack.c.b16 %v523, %v519
    %v892 = vpack.c.b16 %v528, %v524
    %v893 = vpack.c.b16 %v529, %v525
    %v894 = vpack.c.b16 %v530, %v526
    %v895 = vpack.c.b16 %v531, %v527
    %v896 = vpack.c.b16 %v536, %v532
    %v897 = vpack.c.b16 %v537, %v533
    %v898 = vpack.c.b16 %v538, %v534
    %v899 = vpack.c.b16 %v539, %v535
    %v900 = vpack.c.b16 %v544, %v540
    %v901 = vpack.c.b16 %v545, %v541
    %v902 = vpack.c.b16 %v546, %v542
    %v903 = vpack.c.b16 %v547, %v543
    %v904 = vpack.c.b16 %v552, %v548
    %v905 = vpack.c.b16 %v553, %v549
    %v906 = vpack.c.b16 %v554, %v550
    %v907 = vpack.c.b16 %v555, %v551
    %v908 = vpack.c.b16 %v560, %v556
    %v909 = vpack.c.b16 %v561, %v557
    %v910 = vpack.c.b16 %v562, %v558
    %v911 = vpack.c.b16 %v563, %v559
    %v912 = vpack.c.b16 %v568, %v564
    %v913 = vpack.c.b16 %v569, %v565
    %v914 = vpack.c.b16 %v570, %v566
    %v915 = vpack.c.b16 %v571, %v567
    %v916 = vpack.c.b16 %v576, %v572
    %v917 = vpack.c.b16 %v577, %v573
    %v918 = vpack.c.b16 %v578, %v574
    %v919 = vpack.c.b16 %v579, %v575
    %v920 = vpack.c.b16 %v584, %v580
    %v921 = vpack.c.b16 %v585, %v581
    %v922 = vpack.c.b16 %v586, %v582
    %v923 = vpack.c.b16 %v587, %v583
    %v924 = vpack.c.b16 %v592, %v588
    %v925 = vpack.c.b16 %v593, %v589
    %v926 = vpack.c.b16 %v594, %v590
    %v927 = vpack.c.b16 %v595, %v591
    %v928 = vpack.c.b16 %v600, %v596
    %v929 = vpack.c.b16 %v601, %v597
    %v930 = vpack.c.b16 %v602, %v598
    %v931 = vpack.c.b16 %v603, %v599
    %v932 = vpack.c.b16 %v608, %v604
    %v933 = vpack.c.b16 %v609, %v605
    %v934 = vpack.c.b16 %v610, %v606
    %v935 = vpack.c.b16 %v611, %v607
    %v936 = vpack.c.b16 %v616, %v612
    %v937 = vpack.c.b16 %v617, %v613
    %v938 = vpack.c.b16 %v618, %v614
    %v939 = vpack.c.b16 %v619, %v615
    %v940 = vpack.c.b16 %v624, %v620
    %v941 = vpack.c.b16 %v625, %v621
    %v942 = vpack.c.b16 %v626, %v622
    %v943 = vpack.c.b16 %v627, %v623
    %v944 = vpack.c.b16 %v632, %v628
    %v945 = vpack.c.b16 %v633, %v629
    %v946 = vpack.c.b16 %v634, %v630
    %v947 = vpack.c.b16 %v635, %v631
    %v948 = vpack.c.b16 %v640, %v636
    %v949 = vpack.c.b16 %v641, %v637
    %v950 = vpack.c.b16 %v642, %v638
    %v951 = vpack.c.b16 %v643, %v639
    %v952 = vpack.c.b16 %v648, %v644
    %v953 = vpack.c.b16 %v649, %v645
    %v954 = vpack.c.b16 %v650, %v646
    %v955 = vpack.c.b16 %v651, %v647
    %v956 = vpack.c.b16 %v656, %v652
    %v957 = vpack.c.b16 %v657, %v653
    %v958 = vpack.c.b16 %v658, %v654
    %v959 = vpack.c.b16 %v659, %v655
    %v960 = vpack.c.b16 %v664, %v660
    %v961 = vpack.c.b16 %v665, %v661
    %v962 = vpack.c.b16 %v666, %v662
    %v963 = vpack.c.b16 %v667, %v663
    %v964 = vpack.c.b16 %v672, %v668
    %v965 = vpack.c.b16 %v673, %v669
    %v966 = vpack.c.b16 %v674, %v670
    %v967 = vpack.c.b16 %v675, %v671
    %v968 = vpack.c.b16 %v680, %v676
    %v969 = vpack.c.b16 %v681, %v677
    %v970 = vpack.c.b16 %v682, %v678
    %v971 = vpack.c.b16 %v683, %v679
    %v972 = vpack.c.b16 %v688, %v684
    %v973 = vpack.c.b16 %v689, %v685
    %v974 = vpack.c.b16 %v690, %v686
    %v975 = vpack.c.b16 %v691, %v687
    %v976 = vpack.c.b16 %v696, %v692
    %v977 = vpack.c.b16 %v697, %v693
    %v978 = vpack.c.b16 %v698, %v694
    %v979 = vpack.c.b16 %v699, %v695
    %v980 = vpack.c.b16 %v704, %v700
    %v981 = vpack.c.b16 %v705, %v701
    %v982 = vpack.c.b16 %v706, %v702
    %v983 = vpack.c.b16 %v707, %v703
    %v984 = vpack.c.b16 %v712, %v708
    %v985 = vpack.c.b16 %v713, %v709
    %v986 = vpack.c.b16 %v714, %v710
    %v987 = vpack.c.b16 %v715, %v711
    %v988 = vpack.c.b16 %v720, %v716
    %v989 = vpack.c.b16 %v721, %v717
    %v990 = vpack.c.b16 %v722, %v718
    %v991 = vpack.c.b16 %v723, %v719
    %v992 = vpack.c.b16 %v728, %v724
    %v993 = vpack.c.b16 %v729, %v725
    %v994 = vpack.c.b16 %v730, %v726
    %v995 = vpack.c.b16 %v731, %v727
    %v996 = vpack.c.b16 %v736, %v732
    %v997 = vpack.c.b16 %v737, %v733
    %v998 = vpack.c.b16 %v738, %v734
    %v999 = vpack.c.b16 %v739, %v735
    %v1000 = vpack.c.b16 %v744, %v740
    %v1001 = vpack.c.b16 %v745, %v741
    %v1002 = vpack.c.b16 %v746, %v742
    %v1003 = vpack.c.b16 %v747, %v743
    %v1004 = vpack.c.b16 %v752, %v748
    %v1005 = vpack.c.b16 %v753, %v749
    %v1006 = vpack.c.b16 %v754, %v750
    %v1007 = vpack.c.b16 %v755, %v751
    %v1008 = vpack.c.b16 %v760, %v756
    %v1009 = vpack.c.b16 %v761, %v757
    %v1010 = vpack.c.b16 %v762, %v758
    %v1011 = vpack.c.b16 %v763, %v759
    %v1012 = vpack.c.b16 %v768, %v764
    %v1013 = vpack.c.b16 %v769, %v765
    %v1014 = vpack.c.b16 %v770, %v766
    %v1015 = vpack.c.b16 %v771, %v767
    %v1016 = vpack.c.b16 %v776, %v772
    %v1017 = vpack.c.b16 %v777, %v773
    %v1018 = vpack.c.b16 %v778, %v774
    %v1019 = vpack.c.b16 %v779, %v775
    %v1020 = vpack.c.b16 %v784, %v780
    %v1021 = vpack.c.b16 %v785, %v781
    %v1022 = vpack.c.b16 %v786, %v782
    %v1023 = vpack.c.b16 %v787, %v783
    %v1024 = vpack.c.b16 %v792, %v788
    %v1025 = vpack.c.b16 %v793, %v789
    %v1026 = vpack.c.b16 %v794, %v790
    %v1027 = vpack.c.b16 %v795, %v791
    %v1028 = vpack.c.b16 %v800, %v796
    %v1029 = vpack.c.b16 %v801, %v797
    %v1030 = vpack.c.b16 %v802, %v798
    %v1031 = vpack.c.b16 %v803, %v799
    %v1032 = vpack.c.b16 %v808, %v804
    %v1033 = vpack.c.b16 %v809, %v805
    %v1034 = vpack.c.b16 %v810, %v806
    %v1035 = vpack.c.b16 %v811, %v807
    %v1036 = vpack.c.b16 %v816, %v812
    %v1037 = vpack.c.b16 %v817, %v813
    %v1038 = vpack.c.b16 %v818, %v814
    %v1039 = vpack.c.b16 %v819, %v815
    %v1040 = vpack.c.b16 %v824, %v820
    %v1041 = vpack.c.b16 %v825, %v821
    %v1042 = vpack.c.b16 %v826, %v822
    %v1043 = vpack.c.b16 %v827, %v823
    %v1044 = vpack.c.b16 %v832, %v828
    %v1045 = vpack.c.b16 %v833, %v829
    %v1046 = vpack.c.b16 %v834, %v830
    %v1047 = vpack.c.b16 %v835, %v831
    %v1048 = vpack.c.b16 %v840, %v836
    %v1049 = vpack.c.b16 %v841, %v837
    %v1050 = vpack.c.b16 %v842, %v838
    %v1051 = vpack.c.b16 %v843, %v839
    %v1052 = vpack.c.b16 %v848, %v844
    %v1053 = vpack.c.b16 %v849, %v845
    %v1054 = vpack.c.b16 %v850, %v846
    %v1055 = vpack.c.b16 %v851, %v847
    %v1056 = vpack.c.b16 %v856, %v852
    %v1057 = vpack.c.b16 %v857, %v853
    %v1058 = vpack.c.b16 %v858, %v854
    %v1059 = vpack.c.b16 %v859, %v855
    %v1060 = vpack.c.b16 %v864, %v860
    %v1061 = vpack.c.b16 %v865, %v861
    %v1062 = vpack.c.b16 %v866, %v862
    %v1063 = vpack.c.b16 %v867, %v863
    %vm1260 = vcmask 130048
    %v1262 = vsel %vm1260, %v61, 0
    %1264 = vmatprep.subr.bf16.mxu0 %v869
    %1265 = vmatpush1.bf16.msra.mxu0 %v868
    %1266 = vmatprep.subr.bf16.mxu0 %v873
    %1267 = vmatpush1.bf16.msra.mxu0 %v872
    %1268 = vmatprep.subr.bf16.mxu0 %v877
    %1269 = vmatpush1.bf16.msra.mxu0 %v876
    %1270 = vmatprep.subr.bf16.mxu0 %v881
    %1271 = vmatpush1.bf16.msra.mxu0 %v880
    %1272 = vmatprep.subr.bf16.mxu0 %v885
    %1273 = vmatpush1.bf16.msra.mxu0 %v884
    %1274 = vmatprep.subr.bf16.mxu0 %v889
    %1275 = vmatpush1.bf16.msra.mxu0 %v888
    %1276 = vmatprep.subr.bf16.mxu0 %v893
    %1277 = vmatpush1.bf16.msra.mxu0 %v892
    %1278 = vmatprep.subr.bf16.mxu0 %v897
    %1279 = vmatpush1.bf16.msra.mxu0 %v896
    %1280 = vmatprep.subr.bf16.mxu0 %v901
    %1281 = vmatpush1.bf16.msra.mxu0 %v900
    %1282 = vmatprep.subr.bf16.mxu0 %v905
    %1283 = vmatpush1.bf16.msra.mxu0 %v904
    %1284 = vmatprep.subr.bf16.mxu0 %v909
    %1285 = vmatpush1.bf16.msra.mxu0 %v908
    %1286 = vmatprep.subr.bf16.mxu0 %v913
    %1287 = vmatpush1.bf16.msra.mxu0 %v912
    %1288 = vmatprep.subr.bf16.mxu0 %v917
    %1289 = vmatpush1.bf16.msra.mxu0 %v916
    %1290 = vmatprep.subr.bf16.mxu0 %v921
    %1291 = vmatpush1.bf16.msra.mxu0 %v920
    %1292 = vmatprep.subr.bf16.mxu0 %v925
    %1293 = vmatpush1.bf16.msra.mxu0 %v924
    %1294 = vmatprep.subr.bf16.mxu0 %v929
    %1295 = vmatpush1.bf16.msra.mxu0 %v928
    %1296 = vmatprep.mubr.bf16.mxu0 %v56
    %1297 = vmatmul.mubr.bf16.gmra.mrb[0].mxu0 %v55
    %v1298 = vpop.f32.mrb[0].mxu0
    %v1299 = vadd.f32 %v263, %v1298
    %v1300 = vpop.f32.mrb[0].mxu0
    %v1301 = vadd.f32 %v267, %v1300
    %v1302 = vpop.f32.mrb[0].mxu0
    %v1303 = vpop.f32.mrb[0].mxu0
    %1304 = vdwg.mxu0
    %1305 = vmatprep.subr.bf16.mxu0 %v933
    %1306 = vmatpush1.bf16.msra.mxu0 %v932
    %1307 = vmatprep.subr.bf16.mxu0 %v937
    %1308 = vmatpush1.bf16.msra.mxu0 %v936
    %1309 = vmatprep.subr.bf16.mxu0 %v941
    %1310 = vmatpush1.bf16.msra.mxu0 %v940
    %1311 = vmatprep.subr.bf16.mxu0 %v945
    %1312 = vmatpush1.bf16.msra.mxu0 %v944
    %1313 = vmatprep.subr.bf16.mxu0 %v949
    %1314 = vmatpush1.bf16.msra.mxu0 %v948
    %1315 = vmatprep.subr.bf16.mxu0 %v953
    %1316 = vmatpush1.bf16.msra.mxu0 %v952
    %1317 = vmatprep.subr.bf16.mxu0 %v957
    %1318 = vmatpush1.bf16.msra.mxu0 %v956
    %1319 = vmatprep.subr.bf16.mxu0 %v961
    %1320 = vmatpush1.bf16.msra.mxu0 %v960
    %1321 = vmatprep.subr.bf16.mxu0 %v965
    %1322 = vmatpush1.bf16.msra.mxu0 %v964
    %1323 = vmatprep.subr.bf16.mxu0 %v969
    %1324 = vmatpush1.bf16.msra.mxu0 %v968
    %1325 = vmatprep.subr.bf16.mxu0 %v973
    %1326 = vmatpush1.bf16.msra.mxu0 %v972
    %1327 = vmatprep.subr.bf16.mxu0 %v977
    %1328 = vmatpush1.bf16.msra.mxu0 %v976
    %1329 = vmatprep.subr.bf16.mxu0 %v981
    %1330 = vmatpush1.bf16.msra.mxu0 %v980
    %1331 = vmatprep.subr.bf16.mxu0 %v985
    %1332 = vmatpush1.bf16.msra.mxu0 %v984
    %1333 = vmatprep.subr.bf16.mxu0 %v989
    %1334 = vmatpush1.bf16.msra.mxu0 %v988
    %1335 = vmatprep.subr.bf16.mxu0 %v993
    %1336 = vmatpush1.bf16.msra.mxu0 %v992
    %1337 = vmatprep.mubr.bf16.mxu0 %v58
    %1338 = vmatmul.mubr.bf16.gmra.mrb[0].mxu0 %v57
    %v1339 = vpop.f32.mrb[0].mxu0
    %v1340 = vadd.f32 %v1299, %v1339
    %v1341 = vpop.f32.mrb[0].mxu0
    %v1342 = vadd.f32 %v1301, %v1341
    %v1343 = vpop.f32.mrb[0].mxu0
    %v1344 = vpop.f32.mrb[0].mxu0
    %1345 = vdwg.mxu0
    %1346 = vmatprep.subr.bf16.mxu0 %v997
    %1347 = vmatpush1.bf16.msra.mxu0 %v996
    %1348 = vmatprep.subr.bf16.mxu0 %v1001
    %1349 = vmatpush1.bf16.msra.mxu0 %v1000
    %1350 = vmatprep.subr.bf16.mxu0 %v1005
    %1351 = vmatpush1.bf16.msra.mxu0 %v1004
    %1352 = vmatprep.subr.bf16.mxu0 %v1009
    %1353 = vmatpush1.bf16.msra.mxu0 %v1008
    %1354 = vmatprep.subr.bf16.mxu0 %v1013
    %1355 = vmatpush1.bf16.msra.mxu0 %v1012
    %1356 = vmatprep.subr.bf16.mxu0 %v1017
    %1357 = vmatpush1.bf16.msra.mxu0 %v1016
    %1358 = vmatprep.subr.bf16.mxu0 %v1021
    %1359 = vmatpush1.bf16.msra.mxu0 %v1020
    %1360 = vmatprep.subr.bf16.mxu0 %v1025
    %1361 = vmatpush1.bf16.msra.mxu0 %v1024
    %1362 = vmatprep.subr.bf16.mxu0 %v1029
    %1363 = vmatpush1.bf16.msra.mxu0 %v1028
    %1364 = vmatprep.subr.bf16.mxu0 %v1033
    %1365 = vmatpush1.bf16.msra.mxu0 %v1032
    %1366 = vmatprep.subr.bf16.mxu0 %v1037
    %1367 = vmatpush1.bf16.msra.mxu0 %v1036
    %1368 = vmatprep.subr.bf16.mxu0 %v1041
    %1369 = vmatpush1.bf16.msra.mxu0 %v1040
    %1370 = vmatprep.subr.bf16.mxu0 %v1045
    %1371 = vmatpush1.bf16.msra.mxu0 %v1044
    %1372 = vmatprep.subr.bf16.mxu0 %v1049
    %1373 = vmatpush1.bf16.msra.mxu0 %v1048
    %1374 = vmatprep.subr.bf16.mxu0 %v1053
    %1375 = vmatpush1.bf16.msra.mxu0 %v1052
    %1376 = vmatprep.subr.bf16.mxu0 %v1057
    %1377 = vmatpush1.bf16.msra.mxu0 %v1056
    %1378 = vmatprep.mubr.bf16.mxu0 %v60
    %1379 = vmatmul.mubr.bf16.gmra.mrb[0].mxu0 %v59
    %v1380 = vpop.f32.mrb[0].mxu0
    %v1381 = vadd.f32 %v1340, %v1380
    %v1382 = vpop.f32.mrb[0].mxu0
    %v1383 = vadd.f32 %v1342, %v1382
    %v1384 = vpop.f32.mrb[0].mxu0
    %v1385 = vpop.f32.mrb[0].mxu0
    %1386 = vdwg.mxu0
    %1387 = vmatprep.subr.bf16.mxu0 %v1061
    %1388 = vmatpush1.bf16.msra.mxu0 %v1060
    %1389 = vmatprep.subr.bf16.mxu0 0
    %1390 = vmatpush1.bf16.msra.mxu0 0
    %1391 = vmatprep.subr.bf16.mxu0 0
    %1392 = vmatpush1.bf16.msra.mxu0 0
    %1393 = vmatprep.subr.bf16.mxu0 0
    %1394 = vmatpush1.bf16.msra.mxu0 0
    %1395 = vmatprep.subr.bf16.mxu0 0
    %1396 = vmatpush1.bf16.msra.mxu0 0
    %1397 = vmatprep.subr.bf16.mxu0 0
    %1398 = vmatpush1.bf16.msra.mxu0 0
    %1399 = vmatprep.subr.bf16.mxu0 0
    %1400 = vmatpush1.bf16.msra.mxu0 0
    %1401 = vmatprep.subr.bf16.mxu0 0
    %1402 = vmatpush1.bf16.msra.mxu0 0
    %1403 = vmatprep.subr.bf16.mxu0 0
    %1404 = vmatpush1.bf16.msra.mxu0 0
    %1405 = vmatprep.subr.bf16.mxu0 0
    %1406 = vmatpush1.bf16.msra.mxu0 0
    %1407 = vmatprep.subr.bf16.mxu0 0
    %1408 = vmatpush1.bf16.msra.mxu0 0
    %1409 = vmatprep.subr.bf16.mxu0 0
    %1410 = vmatpush1.bf16.msra.mxu0 0
    %1411 = vmatprep.subr.bf16.mxu0 0
    %1412 = vmatpush1.bf16.msra.mxu0 0
    %1413 = vmatprep.subr.bf16.mxu0 0
    %1414 = vmatpush1.bf16.msra.mxu0 0
    %1415 = vmatprep.subr.bf16.mxu0 0
    %1416 = vmatpush1.bf16.msra.mxu0 0
    %1417 = vmatprep.subr.bf16.mxu0 0
    %1418 = vmatpush1.bf16.msra.mxu0 0
    %1419 = vmatprep.mubr.bf16.mxu0 0
    %1420 = vmatmul.mubr.bf16.gmra.mrb[0].mxu0 %v1262
    %v1421 = vpop.f32.mrb[0].mxu0
    %v1422 = vadd.f32 %v1381, %v1421
    %v1423 = vpop.f32.mrb[0].mxu0
    %v1424 = vadd.f32 %v1383, %v1423
    %v1425 = vpop.f32.mrb[0].mxu0
    %v1426 = vpop.f32.mrb[0].mxu0
    %1427 = vdwg.mxu0
    %1428 = vmatprep.subr.bf16.mxu0 %v871
    %1429 = vmatpush1.bf16.msra.mxu0 %v870
    %1430 = vmatprep.subr.bf16.mxu0 %v875
    %1431 = vmatpush1.bf16.msra.mxu0 %v874
    %1432 = vmatprep.subr.bf16.mxu0 %v879
    %1433 = vmatpush1.bf16.msra.mxu0 %v878
    %1434 = vmatprep.subr.bf16.mxu0 %v883
    %1435 = vmatpush1.bf16.msra.mxu0 %v882
    %1436 = vmatprep.subr.bf16.mxu0 %v887
    %1437 = vmatpush1.bf16.msra.mxu0 %v886
    %1438 = vmatprep.subr.bf16.mxu0 %v891
    %1439 = vmatpush1.bf16.msra.mxu0 %v890
    %1440 = vmatprep.subr.bf16.mxu0 %v895
    %1441 = vmatpush1.bf16.msra.mxu0 %v894
    %1442 = vmatprep.subr.bf16.mxu0 %v899
    %1443 = vmatpush1.bf16.msra.mxu0 %v898
    %1444 = vmatprep.subr.bf16.mxu0 %v903
    %1445 = vmatpush1.bf16.msra.mxu0 %v902
    %1446 = vmatprep.subr.bf16.mxu0 %v907
    %1447 = vmatpush1.bf16.msra.mxu0 %v906
    %1448 = vmatprep.subr.bf16.mxu0 %v911
    %1449 = vmatpush1.bf16.msra.mxu0 %v910
    %1450 = vmatprep.subr.bf16.mxu0 %v915
    %1451 = vmatpush1.bf16.msra.mxu0 %v914
    %1452 = vmatprep.subr.bf16.mxu0 %v919
    %1453 = vmatpush1.bf16.msra.mxu0 %v918
    %1454 = vmatprep.subr.bf16.mxu0 %v923
    %1455 = vmatpush1.bf16.msra.mxu0 %v922
    %1456 = vmatprep.subr.bf16.mxu0 %v927
    %1457 = vmatpush1.bf16.msra.mxu0 %v926
    %1458 = vmatprep.subr.bf16.mxu0 %v931
    %1459 = vmatpush1.bf16.msra.mxu0 %v930
    %1460 = vmatprep.mubr.bf16.mxu0 %v56
    %1461 = vmatmul.mubr.bf16.gmra.mrb[0].mxu0 %v55
    %v1462 = vpop.f32.mrb[0].mxu0
    %v1463 = vadd.f32 %v271, %v1462
    %v1464 = vpop.f32.mrb[0].mxu0
    %v1465 = vadd.f32 %v275, %v1464
    %v1466 = vpop.f32.mrb[0].mxu0
    %v1467 = vpop.f32.mrb[0].mxu0
    %1468 = vdwg.mxu0
    %1469 = vmatprep.subr.bf16.mxu0 %v935
    %1470 = vmatpush1.bf16.msra.mxu0 %v934
    %1471 = vmatprep.subr.bf16.mxu0 %v939
    %1472 = vmatpush1.bf16.msra.mxu0 %v938
    %1473 = vmatprep.subr.bf16.mxu0 %v943
    %1474 = vmatpush1.bf16.msra.mxu0 %v942
    %1475 = vmatprep.subr.bf16.mxu0 %v947
    %1476 = vmatpush1.bf16.msra.mxu0 %v946
    %1477 = vmatprep.subr.bf16.mxu0 %v951
    %1478 = vmatpush1.bf16.msra.mxu0 %v950
    %1479 = vmatprep.subr.bf16.mxu0 %v955
    %1480 = vmatpush1.bf16.msra.mxu0 %v954
    %1481 = vmatprep.subr.bf16.mxu0 %v959
    %1482 = vmatpush1.bf16.msra.mxu0 %v958
    %1483 = vmatprep.subr.bf16.mxu0 %v963
    %1484 = vmatpush1.bf16.msra.mxu0 %v962
    %1485 = vmatprep.subr.bf16.mxu0 %v967
    %1486 = vmatpush1.bf16.msra.mxu0 %v966
    %1487 = vmatprep.subr.bf16.mxu0 %v971
    %1488 = vmatpush1.bf16.msra.mxu0 %v970
    %1489 = vmatprep.subr.bf16.mxu0 %v975
    %1490 = vmatpush1.bf16.msra.mxu0 %v974
    %1491 = vmatprep.subr.bf16.mxu0 %v979
    %1492 = vmatpush1.bf16.msra.mxu0 %v978
    %1493 = vmatprep.subr.bf16.mxu0 %v983
    %1494 = vmatpush1.bf16.msra.mxu0 %v982
    %1495 = vmatprep.subr.bf16.mxu0 %v987
    %1496 = vmatpush1.bf16.msra.mxu0 %v986
    %1497 = vmatprep.subr.bf16.mxu0 %v991
    %1498 = vmatpush1.bf16.msra.mxu0 %v990
    %1499 = vmatprep.subr.bf16.mxu0 %v995
    %1500 = vmatpush1.bf16.msra.mxu0 %v994
    %1501 = vmatprep.mubr.bf16.mxu0 %v58
    %1502 = vmatmul.mubr.bf16.gmra.mrb[0].mxu0 %v57
    %v1503 = vpop.f32.mrb[0].mxu0
    %v1504 = vadd.f32 %v1463, %v1503
    %v1505 = vpop.f32.mrb[0].mxu0
    %v1506 = vadd.f32 %v1465, %v1505
    %v1507 = vpop.f32.mrb[0].mxu0
    %v1508 = vpop.f32.mrb[0].mxu0
    %1509 = vdwg.mxu0
    %1510 = vmatprep.subr.bf16.mxu0 %v999
    %1511 = vmatpush1.bf16.msra.mxu0 %v998
    %1512 = vmatprep.subr.bf16.mxu0 %v1003
    %1513 = vmatpush1.bf16.msra.mxu0 %v1002
    %1514 = vmatprep.subr.bf16.mxu0 %v1007
    %1515 = vmatpush1.bf16.msra.mxu0 %v1006
    %1516 = vmatprep.subr.bf16.mxu0 %v1011
    %1517 = vmatpush1.bf16.msra.mxu0 %v1010
    %1518 = vmatprep.subr.bf16.mxu0 %v1015
    %1519 = vmatpush1.bf16.msra.mxu0 %v1014
    %1520 = vmatprep.subr.bf16.mxu0 %v1019
    %1521 = vmatpush1.bf16.msra.mxu0 %v1018
    %1522 = vmatprep.subr.bf16.mxu0 %v1023
    %1523 = vmatpush1.bf16.msra.mxu0 %v1022
    %1524 = vmatprep.subr.bf16.mxu0 %v1027
    %1525 = vmatpush1.bf16.msra.mxu0 %v1026
    %1526 = vmatprep.subr.bf16.mxu0 %v1031
    %1527 = vmatpush1.bf16.msra.mxu0 %v1030
    %1528 = vmatprep.subr.bf16.mxu0 %v1035
    %1529 = vmatpush1.bf16.msra.mxu0 %v1034
    %1530 = vmatprep.subr.bf16.mxu0 %v1039
    %1531 = vmatpush1.bf16.msra.mxu0 %v1038
    %1532 = vmatprep.subr.bf16.mxu0 %v1043
    %1533 = vmatpush1.bf16.msra.mxu0 %v1042
    %1534 = vmatprep.subr.bf16.mxu0 %v1047
    %1535 = vmatpush1.bf16.msra.mxu0 %v1046
    %1536 = vmatprep.subr.bf16.mxu0 %v1051
    %1537 = vmatpush1.bf16.msra.mxu0 %v1050
    %1538 = vmatprep.subr.bf16.mxu0 %v1055
    %1539 = vmatpush1.bf16.msra.mxu0 %v1054
    %1540 = vmatprep.subr.bf16.mxu0 %v1059
    %1541 = vmatpush1.bf16.msra.mxu0 %v1058
    %1542 = vmatprep.mubr.bf16.mxu0 %v60
    %1543 = vmatmul.mubr.bf16.gmra.mrb[0].mxu0 %v59
    %v1544 = vpop.f32.mrb[0].mxu0
    %v1545 = vadd.f32 %v1504, %v1544
    %v1546 = vpop.f32.mrb[0].mxu0
    %v1547 = vadd.f32 %v1506, %v1546
    %v1548 = vpop.f32.mrb[0].mxu0
    %v1549 = vpop.f32.mrb[0].mxu0
    %1550 = vdwg.mxu0
    %1551 = vmatprep.subr.bf16.mxu0 %v1063
    %1552 = vmatpush1.bf16.msra.mxu0 %v1062
    %1553 = vmatprep.subr.bf16.mxu0 0
    %1554 = vmatpush1.bf16.msra.mxu0 0
    %1555 = vmatprep.subr.bf16.mxu0 0
    %1556 = vmatpush1.bf16.msra.mxu0 0
    %1557 = vmatprep.subr.bf16.mxu0 0
    %1558 = vmatpush1.bf16.msra.mxu0 0
    %1559 = vmatprep.subr.bf16.mxu0 0
    %1560 = vmatpush1.bf16.msra.mxu0 0
    %1561 = vmatprep.subr.bf16.mxu0 0
    %1562 = vmatpush1.bf16.msra.mxu0 0
    %1563 = vmatprep.subr.bf16.mxu0 0
    %1564 = vmatpush1.bf16.msra.mxu0 0
    %1565 = vmatprep.subr.bf16.mxu0 0
    %1566 = vmatpush1.bf16.msra.mxu0 0
    %1567 = vmatprep.subr.bf16.mxu0 0
    %1568 = vmatpush1.bf16.msra.mxu0 0
    %1569 = vmatprep.subr.bf16.mxu0 0
    %1570 = vmatpush1.bf16.msra.mxu0 0
    %1571 = vmatprep.subr.bf16.mxu0 0
    %1572 = vmatpush1.bf16.msra.mxu0 0
    %1573 = vmatprep.subr.bf16.mxu0 0
    %1574 = vmatpush1.bf16.msra.mxu0 0
    %1575 = vmatprep.subr.bf16.mxu0 0
    %1576 = vmatpush1.bf16.msra.mxu0 0
    %1577 = vmatprep.subr.bf16.mxu0 0
    %1578 = vmatpush1.bf16.msra.mxu0 0
    %1579 = vmatprep.subr.bf16.mxu0 0
    %1580 = vmatpush1.bf16.msra.mxu0 0
    %1581 = vmatprep.subr.bf16.mxu0 0
    %1582 = vmatpush1.bf16.msra.mxu0 0
    %1583 = vmatprep.mubr.bf16.mxu0 0
    %1584 = vmatmul.mubr.bf16.gmra.mrb[0].mxu0 %v1262
    %v1585 = vpop.f32.mrb[0].mxu0
    %v1586 = vadd.f32 %v1545, %v1585
    %v1587 = vpop.f32.mrb[0].mxu0
    %v1588 = vadd.f32 %v1547, %v1587
    %v1589 = vpop.f32.mrb[0].mxu0
    %v1590 = vpop.f32.mrb[0].mxu0
    %1591 = vdwg.mxu0
    %v1592 = vmax.f32 %v1422, 0.0
    %v1593 = vmax.f32 %v1424, 0.0
    %v1594 = vmax.f32 %v1586, 0.0
    %v1595 = vmax.f32 %v1588, 0.0
    %v1596 = vpack.c.bf16 %v1592, %v1592
    %v1597 = vpack.c.bf16 %v1593, %v1593
    %v1598 = vpack.c.bf16 %v1594, %v1594
    %v1599 = vpack.c.bf16 %v1595, %v1595
    %v1600 = vld [vmem:[%s3] sm:$0xff]
    %v1601 = vld [vmem:[%s3 + $0x8] sm:$0xff]
    %v1602 = vld [vmem:[%s3 + $0x10] sm:$0xff]
    %v1603 = vld [vmem:[%s3 + $0x18] sm:$0xff]
    %v1604 = vld [vmem:[%s3 + $0x20] sm:$0xff]
    %v1605 = vld [vmem:[%s3 + $0x28] sm:$0xff]
    %v1606 = vld [vmem:[%s3 + $0x30] sm:$0xff]
    %v1607 = vld [vmem:[%s3 + $0x38] sm:$0xff]
    %v1608 = vld [vmem:[%s3 + $0x40] sm:$0xff]
    %v1609 = vld [vmem:[%s3 + $0x48] sm:$0xff]
    %v1610 = vld [vmem:[%s3 + $0x50] sm:$0xff]
    %v1611 = vld [vmem:[%s3 + $0x58] sm:$0xff]
    %v1612 = vld [vmem:[%s3 + $0x60] sm:$0xff]
    %v1613 = vld [vmem:[%s3 + $0x68] sm:$0xff]
    %v1614 = vld [vmem:[%s3 + $0x70] sm:$0xff]
    %v1615 = vld [vmem:[%s3 + $0x78] sm:$0xff]
    %v1616 = vld [vmem:[%s3 + $0x80] sm:$0xff]
    %v1617 = vld [vmem:[%s3 + $0x88] sm:$0xff]
    %v1618 = vld [vmem:[%s3 + $0x90] sm:$0xff]
    %v1619 = vld [vmem:[%s3 + $0x98] sm:$0xff]
    %v1620 = vld [vmem:[%s3 + $0xa0] sm:$0xff]
    %v1621 = vld [vmem:[%s3 + $0xa8] sm:$0xff]
    %v1622 = vld [vmem:[%s3 + $0xb0] sm:$0xff]
    %v1623 = vld [vmem:[%s3 + $0xb8] sm:$0xff]
    %v1624 = vld [vmem:[%s3 + $0xc0] sm:$0xff]
    %v1625 = vld [vmem:[%s3 + $0xc8] sm:$0xff]
    %v1626 = vld [vmem:[%s3 + $0xd0] sm:$0xff]
    %v1627 = vld [vmem:[%s3 + $0xd8] sm:$0xff]
    %v1628 = vld [vmem:[%s3 + $0xe0] sm:$0xff]
    %v1629 = vld [vmem:[%s3 + $0xe8] sm:$0xff]
    %v1630 = vld [vmem:[%s3 + $0xf0] sm:$0xff]
    %v1631 = vld [vmem:[%s3 + $0xf8] sm:$0xff]
    %v1632 = vld [vmem:[%s3 + $0x100] sm:$0xff]
    %v1633 = vld [vmem:[%s3 + $0x108] sm:$0xff]
    %v1634 = vld [vmem:[%s3 + $0x110] sm:$0xff]
    %v1635 = vld [vmem:[%s3 + $0x118] sm:$0xff]
    %v1636 = vld [vmem:[%s3 + $0x120] sm:$0xff]
    %v1637 = vld [vmem:[%s3 + $0x128] sm:$0xff]
    %v1638 = vld [vmem:[%s3 + $0x130] sm:$0xff]
    %v1639 = vld [vmem:[%s3 + $0x138] sm:$0xff]
    %v1640 = vld [vmem:[%s3 + $0x140] sm:$0xff]
    %v1641 = vld [vmem:[%s3 + $0x148] sm:$0xff]
    %v1642 = vld [vmem:[%s3 + $0x150] sm:$0xff]
    %v1643 = vld [vmem:[%s3 + $0x158] sm:$0xff]
    %v1644 = vld [vmem:[%s3 + $0x160] sm:$0xff]
    %v1645 = vld [vmem:[%s3 + $0x168] sm:$0xff]
    %v1646 = vld [vmem:[%s3 + $0x170] sm:$0xff]
    %v1647 = vld [vmem:[%s3 + $0x178] sm:$0xff]
    %v1648 = vld [vmem:[%s3 + $0x180] sm:$0xff]
    %v1649 = vld [vmem:[%s3 + $0x188] sm:$0xff]
    %v1650 = vld [vmem:[%s3 + $0x190] sm:$0xff]
    %v1651 = vld [vmem:[%s3 + $0x198] sm:$0xff]
    %v1652 = vld [vmem:[%s3 + $0x1a0] sm:$0xff]
    %v1653 = vld [vmem:[%s3 + $0x1a8] sm:$0xff]
    %v1654 = vld [vmem:[%s3 + $0x1b0] sm:$0xff]
    %v1655 = vld [vmem:[%s3 + $0x1b8] sm:$0xff]
    %v1656 = vld [vmem:[%s3 + $0x1c0] sm:$0xff]
    %v1657 = vld [vmem:[%s3 + $0x1c8] sm:$0xff]
    %v1658 = vld [vmem:[%s3 + $0x1d0] sm:$0xff]
    %v1659 = vld [vmem:[%s3 + $0x1d8] sm:$0xff]
    %v1660 = vld [vmem:[%s3 + $0x1e0] sm:$0xff]
    %v1661 = vld [vmem:[%s3 + $0x1e8] sm:$0xff]
    %v1662 = vld [vmem:[%s3 + $0x1f0] sm:$0xff]
    %v1663 = vld [vmem:[%s3 + $0x1f8] sm:$0xff]
    %v1664 = vld [vmem:[%s4] sm:$0x3]
    %v1666 = vlaneseq
    %v1667 = vshrl.u32 %v1666, 7
    %v1668 = vsub.s32 0, %v1667
    %v1669 = vrot.slane %v1664, %v1668
    %v1670 = vlaneseq
    %v1671 = vshrl.u32 %v1670, 7
    %v1672 = vsub.s32 1, %v1671
    %v1673 = vrot.slane %v1664, %v1672
    %v1740 = vunpack.c.l.b16 %v1600
    %v1741 = vunpack.c.h.b16 %v1600
    %v1742 = vunpack.c.l.b16 %v1601
    %v1743 = vunpack.c.h.b16 %v1601
    %v1744 = vunpack.c.l.b16 %v1602
    %v1745 = vunpack.c.h.b16 %v1602
    %v1746 = vunpack.c.l.b16 %v1603
    %v1747 = vunpack.c.h.b16 %v1603
    %v1748 = vunpack.c.l.b16 %v1604
    %v1749 = vunpack.c.h.b16 %v1604
    %v1750 = vunpack.c.l.b16 %v1605
    %v1751 = vunpack.c.h.b16 %v1605
    %v1752 = vunpack.c.l.b16 %v1606
    %v1753 = vunpack.c.h.b16 %v1606
    %v1754 = vunpack.c.l.b16 %v1607
    %v1755 = vunpack.c.h.b16 %v1607
    %v1756 = vunpack.c.l.b16 %v1608
    %v1757 = vunpack.c.h.b16 %v1608
    %v1758 = vunpack.c.l.b16 %v1609
    %v1759 = vunpack.c.h.b16 %v1609
    %v1760 = vunpack.c.l.b16 %v1610
    %v1761 = vunpack.c.h.b16 %v1610
    %v1762 = vunpack.c.l.b16 %v1611
    %v1763 = vunpack.c.h.b16 %v1611
    %v1764 = vunpack.c.l.b16 %v1612
    %v1765 = vunpack.c.h.b16 %v1612
    %v1766 = vunpack.c.l.b16 %v1613
    %v1767 = vunpack.c.h.b16 %v1613
    %v1768 = vunpack.c.l.b16 %v1614
    %v1769 = vunpack.c.h.b16 %v1614
    %v1770 = vunpack.c.l.b16 %v1615
    %v1771 = vunpack.c.h.b16 %v1615
    %v1772 = vunpack.c.l.b16 %v1616
    %v1773 = vunpack.c.h.b16 %v1616
    %v1774 = vunpack.c.l.b16 %v1617
    %v1775 = vunpack.c.h.b16 %v1617
    %v1776 = vunpack.c.l.b16 %v1618
    %v1777 = vunpack.c.h.b16 %v1618
    %v1778 = vunpack.c.l.b16 %v1619
    %v1779 = vunpack.c.h.b16 %v1619
    %v1780 = vunpack.c.l.b16 %v1620
    %v1781 = vunpack.c.h.b16 %v1620
    %v1782 = vunpack.c.l.b16 %v1621
    %v1783 = vunpack.c.h.b16 %v1621
    %v1784 = vunpack.c.l.b16 %v1622
    %v1785 = vunpack.c.h.b16 %v1622
    %v1786 = vunpack.c.l.b16 %v1623
    %v1787 = vunpack.c.h.b16 %v1623
    %v1788 = vunpack.c.l.b16 %v1624
    %v1789 = vunpack.c.h.b16 %v1624
    %v1790 = vunpack.c.l.b16 %v1625
    %v1791 = vunpack.c.h.b16 %v1625
    %v1792 = vunpack.c.l.b16 %v1626
    %v1793 = vunpack.c.h.b16 %v1626
    %v1794 = vunpack.c.l.b16 %v1627
    %v1795 = vunpack.c.h.b16 %v1627
    %v1796 = vunpack.c.l.b16 %v1628
    %v1797 = vunpack.c.h.b16 %v1628
    %v1798 = vunpack.c.l.b16 %v1629
    %v1799 = vunpack.c.h.b16 %v1629
    %v1800 = vunpack.c.l.b16 %v1630
    %v1801 = vunpack.c.h.b16 %v1630
    %v1802 = vunpack.c.l.b16 %v1631
    %v1803 = vunpack.c.h.b16 %v1631
    %v1804 = vunpack.c.l.b16 %v1632
    %v1805 = vunpack.c.h.b16 %v1632
    %v1806 = vunpack.c.l.b16 %v1633
    %v1807 = vunpack.c.h.b16 %v1633
    %v1808 = vunpack.c.l.b16 %v1634
    %v1809 = vunpack.c.h.b16 %v1634
    %v1810 = vunpack.c.l.b16 %v1635
    %v1811 = vunpack.c.h.b16 %v1635
    %v1812 = vunpack.c.l.b16 %v1636
    %v1813 = vunpack.c.h.b16 %v1636
    %v1814 = vunpack.c.l.b16 %v1637
    %v1815 = vunpack.c.h.b16 %v1637
    %v1816 = vunpack.c.l.b16 %v1638
    %v1817 = vunpack.c.h.b16 %v1638
    %v1818 = vunpack.c.l.b16 %v1639
    %v1819 = vunpack.c.h.b16 %v1639
    %v1820 = vunpack.c.l.b16 %v1640
    %v1821 = vunpack.c.h.b16 %v1640
    %v1822 = vunpack.c.l.b16 %v1641
    %v1823 = vunpack.c.h.b16 %v1641
    %v1824 = vunpack.c.l.b16 %v1642
    %v1825 = vunpack.c.h.b16 %v1642
    %v1826 = vunpack.c.l.b16 %v1643
    %v1827 = vunpack.c.h.b16 %v1643
    %v1828 = vunpack.c.l.b16 %v1644
    %v1829 = vunpack.c.h.b16 %v1644
    %v1830 = vunpack.c.l.b16 %v1645
    %v1831 = vunpack.c.h.b16 %v1645
    %v1832 = vunpack.c.l.b16 %v1646
    %v1833 = vunpack.c.h.b16 %v1646
    %v1834 = vunpack.c.l.b16 %v1647
    %v1835 = vunpack.c.h.b16 %v1647
    %v1836 = vunpack.c.l.b16 %v1648
    %v1837 = vunpack.c.h.b16 %v1648
    %v1838 = vunpack.c.l.b16 %v1649
    %v1839 = vunpack.c.h.b16 %v1649
    %v1840 = vunpack.c.l.b16 %v1650
    %v1841 = vunpack.c.h.b16 %v1650
    %v1842 = vunpack.c.l.b16 %v1651
    %v1843 = vunpack.c.h.b16 %v1651
    %v1844 = vunpack.c.l.b16 %v1652
    %v1845 = vunpack.c.h.b16 %v1652
    %v1846 = vunpack.c.l.b16 %v1653
    %v1847 = vunpack.c.h.b16 %v1653
    %v1848 = vunpack.c.l.b16 %v1654
    %v1849 = vunpack.c.h.b16 %v1654
    %v1850 = vunpack.c.l.b16 %v1655
    %v1851 = vunpack.c.h.b16 %v1655
    %v1852 = vunpack.c.l.b16 %v1656
    %v1853 = vunpack.c.h.b16 %v1656
    %v1854 = vunpack.c.l.b16 %v1657
    %v1855 = vunpack.c.h.b16 %v1657
    %v1856 = vunpack.c.l.b16 %v1658
    %v1857 = vunpack.c.h.b16 %v1658
    %v1858 = vunpack.c.l.b16 %v1659
    %v1859 = vunpack.c.h.b16 %v1659
    %v1860 = vunpack.c.l.b16 %v1660
    %v1861 = vunpack.c.h.b16 %v1660
    %v1862 = vunpack.c.l.b16 %v1661
    %v1863 = vunpack.c.h.b16 %v1661
    %v1864 = vunpack.c.l.b16 %v1662
    %v1865 = vunpack.c.h.b16 %v1662
    %v1866 = vunpack.c.l.b16 %v1663
    %v1867 = vunpack.c.h.b16 %v1663
    %v1868 = vpack.c.b16 %v1742, %v1740
    %v1869 = vpack.c.b16 %v1743, %v1741
    %v1870 = vpack.c.b16 %v1746, %v1744
    %v1871 = vpack.c.b16 %v1747, %v1745
    %v1872 = vpack.c.b16 %v1750, %v1748
    %v1873 = vpack.c.b16 %v1751, %v1749
    %v1874 = vpack.c.b16 %v1754, %v1752
    %v1875 = vpack.c.b16 %v1755, %v1753
    %v1876 = vpack.c.b16 %v1758, %v1756
    %v1877 = vpack.c.b16 %v1759, %v1757
    %v1878 = vpack.c.b16 %v1762, %v1760
    %v1879 = vpack.c.b16 %v1763, %v1761
    %v1880 = vpack.c.b16 %v1766, %v1764
    %v1881 = vpack.c.b16 %v1767, %v1765
    %v1882 = vpack.c.b16 %v1770, %v1768
    %v1883 = vpack.c.b16 %v1771, %v1769
    %v1884 = vpack.c.b16 %v1774, %v1772
    %v1885 = vpack.c.b16 %v1775, %v1773
    %v1886 = vpack.c.b16 %v1778, %v1776
    %v1887 = vpack.c.b16 %v1779, %v1777
    %v1888 = vpack.c.b16 %v1782, %v1780
    %v1889 = vpack.c.b16 %v1783, %v1781
    %v1890 = vpack.c.b16 %v1786, %v1784
    %v1891 = vpack.c.b16 %v1787, %v1785
    %v1892 = vpack.c.b16 %v1790, %v1788
    %v1893 = vpack.c.b16 %v1791, %v1789
    %v1894 = vpack.c.b16 %v1794, %v1792
    %v1895 = vpack.c.b16 %v1795, %v1793
    %v1896 = vpack.c.b16 %v1798, %v1796
    %v1897 = vpack.c.b16 %v1799, %v1797
    %v1898 = vpack.c.b16 %v1802, %v1800
    %v1899 = vpack.c.b16 %v1803, %v1801
    %v1900 = vpack.c.b16 %v1806, %v1804
    %v1901 = vpack.c.b16 %v1807, %v1805
    %v1902 = vpack.c.b16 %v1810, %v1808
    %v1903 = vpack.c.b16 %v1811, %v1809
    %v1904 = vpack.c.b16 %v1814, %v1812
    %v1905 = vpack.c.b16 %v1815, %v1813
    %v1906 = vpack.c.b16 %v1818, %v1816
    %v1907 = vpack.c.b16 %v1819, %v1817
    %v1908 = vpack.c.b16 %v1822, %v1820
    %v1909 = vpack.c.b16 %v1823, %v1821
    %v1910 = vpack.c.b16 %v1826, %v1824
    %v1911 = vpack.c.b16 %v1827, %v1825
    %v1912 = vpack.c.b16 %v1830, %v1828
    %v1913 = vpack.c.b16 %v1831, %v1829
    %v1914 = vpack.c.b16 %v1834, %v1832
    %v1915 = vpack.c.b16 %v1835, %v1833
    %v1916 = vpack.c.b16 %v1838, %v1836
    %v1917 = vpack.c.b16 %v1839, %v1837
    %v1918 = vpack.c.b16 %v1842, %v1840
    %v1919 = vpack.c.b16 %v1843, %v1841
    %v1920 = vpack.c.b16 %v1846, %v1844
    %v1921 = vpack.c.b16 %v1847, %v1845
    %v1922 = vpack.c.b16 %v1850, %v1848
    %v1923 = vpack.c.b16 %v1851, %v1849
    %v1924 = vpack.c.b16 %v1854, %v1852
    %v1925 = vpack.c.b16 %v1855, %v1853
    %v1926 = vpack.c.b16 %v1858, %v1856
    %v1927 = vpack.c.b16 %v1859, %v1857
    %v1928 = vpack.c.b16 %v1862, %v1860
    %v1929 = vpack.c.b16 %v1863, %v1861
    %v1930 = vpack.c.b16 %v1866, %v1864
    %v1931 = vpack.c.b16 %v1867, %v1865
    %1996 = vmatprep.subr.bf16.mxu0 %v1869
    %1997 = vmatpush1.bf16.msra.mxu0 %v1868
    %1998 = vmatprep.subr.bf16.mxu0 %v1871
    %1999 = vmatpush1.bf16.msra.mxu0 %v1870
    %2000 = vmatprep.subr.bf16.mxu0 %v1873
    %2001 = vmatpush1.bf16.msra.mxu0 %v1872
    %2002 = vmatprep.subr.bf16.mxu0 %v1875
    %2003 = vmatpush1.bf16.msra.mxu0 %v1874
    %2004 = vmatprep.subr.bf16.mxu0 %v1877
    %2005 = vmatpush1.bf16.msra.mxu0 %v1876
    %2006 = vmatprep.subr.bf16.mxu0 %v1879
    %2007 = vmatpush1.bf16.msra.mxu0 %v1878
    %2008 = vmatprep.subr.bf16.mxu0 %v1881
    %2009 = vmatpush1.bf16.msra.mxu0 %v1880
    %2010 = vmatprep.subr.bf16.mxu0 %v1883
    %2011 = vmatpush1.bf16.msra.mxu0 %v1882
    %2012 = vmatprep.subr.bf16.mxu0 %v1885
    %2013 = vmatpush1.bf16.msra.mxu0 %v1884
    %2014 = vmatprep.subr.bf16.mxu0 %v1887
    %2015 = vmatpush1.bf16.msra.mxu0 %v1886
    %2016 = vmatprep.subr.bf16.mxu0 %v1889
    %2017 = vmatpush1.bf16.msra.mxu0 %v1888
    %2018 = vmatprep.subr.bf16.mxu0 %v1891
    %2019 = vmatpush1.bf16.msra.mxu0 %v1890
    %2020 = vmatprep.subr.bf16.mxu0 %v1893
    %2021 = vmatpush1.bf16.msra.mxu0 %v1892
    %2022 = vmatprep.subr.bf16.mxu0 %v1895
    %2023 = vmatpush1.bf16.msra.mxu0 %v1894
    %2024 = vmatprep.subr.bf16.mxu0 %v1897
    %2025 = vmatpush1.bf16.msra.mxu0 %v1896
    %2026 = vmatprep.subr.bf16.mxu0 %v1899
    %2027 = vmatpush1.bf16.msra.mxu0 %v1898
    %2028 = vmatprep.mubr.bf16.mxu0 %v1597
    %2029 = vmatmul.mubr.bf16.gmra.mrb[0].mxu0 %v1596
    %v2030 = vpop.f32.mrb[0].mxu0
    %v2031 = vadd.f32 %v1669, %v2030
    %v2032 = vpop.f32.mrb[0].mxu0
    %v2033 = vadd.f32 %v1673, %v2032
    %v2034 = vpop.f32.mrb[0].mxu0
    %v2035 = vpop.f32.mrb[0].mxu0
    %2036 = vdwg.mxu0
    %2037 = vmatprep.subr.bf16.mxu0 %v1901
    %2038 = vmatpush1.bf16.msra.mxu0 %v1900
    %2039 = vmatprep.subr.bf16.mxu0 %v1903
    %2040 = vmatpush1.bf16.msra.mxu0 %v1902
    %2041 = vmatprep.subr.bf16.mxu0 %v1905
    %2042 = vmatpush1.bf16.msra.mxu0 %v1904
    %2043 = vmatprep.subr.bf16.mxu0 %v1907
    %2044 = vmatpush1.bf16.msra.mxu0 %v1906
    %2045 = vmatprep.subr.bf16.mxu0 %v1909
    %2046 = vmatpush1.bf16.msra.mxu0 %v1908
    %2047 = vmatprep.subr.bf16.mxu0 %v1911
    %2048 = vmatpush1.bf16.msra.mxu0 %v1910
    %2049 = vmatprep.subr.bf16.mxu0 %v1913
    %2050 = vmatpush1.bf16.msra.mxu0 %v1912
    %2051 = vmatprep.subr.bf16.mxu0 %v1915
    %2052 = vmatpush1.bf16.msra.mxu0 %v1914
    %2053 = vmatprep.subr.bf16.mxu0 %v1917
    %2054 = vmatpush1.bf16.msra.mxu0 %v1916
    %2055 = vmatprep.subr.bf16.mxu0 %v1919
    %2056 = vmatpush1.bf16.msra.mxu0 %v1918
    %2057 = vmatprep.subr.bf16.mxu0 %v1921
    %2058 = vmatpush1.bf16.msra.mxu0 %v1920
    %2059 = vmatprep.subr.bf16.mxu0 %v1923
    %2060 = vmatpush1.bf16.msra.mxu0 %v1922
    %2061 = vmatprep.subr.bf16.mxu0 %v1925
    %2062 = vmatpush1.bf16.msra.mxu0 %v1924
    %2063 = vmatprep.subr.bf16.mxu0 %v1927
    %2064 = vmatpush1.bf16.msra.mxu0 %v1926
    %2065 = vmatprep.subr.bf16.mxu0 %v1929
    %2066 = vmatpush1.bf16.msra.mxu0 %v1928
    %2067 = vmatprep.subr.bf16.mxu0 %v1931
    %2068 = vmatpush1.bf16.msra.mxu0 %v1930
    %2069 = vmatprep.mubr.bf16.mxu0 %v1599
    %2070 = vmatmul.mubr.bf16.gmra.mrb[0].mxu0 %v1598
    %v2071 = vpop.f32.mrb[0].mxu0
    %v2072 = vadd.f32 %v2031, %v2071
    %v2073 = vpop.f32.mrb[0].mxu0
    %v2074 = vadd.f32 %v2033, %v2073
    %v2075 = vpop.f32.mrb[0].mxu0
    %v2076 = vpop.f32.mrb[0].mxu0
    %2077 = vdwg.mxu0
    %v2078 = vmax.f32 %v2072, 0.0
    %v2079 = vmax.f32 %v2074, 0.0
    %v2080 = vpack.c.bf16 %v2078, %v2078
    %v2081 = vpack.c.bf16 %v2079, %v2079
    %v2082 = vld [vmem:[%s5] sm:$0xf]
    %v2083 = vld [vmem:[%s5 + $0x4] sm:$0xf]
    %v2084 = vld [vmem:[%s5 + $0x8] sm:$0xf]
    %v2085 = vld [vmem:[%s5 + $0xc] sm:$0xf]
    %v2086 = vld [vmem:[%s5 + $0x10] sm:$0xf]
    %v2087 = vld [vmem:[%s5 + $0x14] sm:$0xf]
    %v2088 = vld [vmem:[%s5 + $0x18] sm:$0xf]
    %v2089 = vld [vmem:[%s5 + $0x1c] sm:$0xf]
    %v2090 = vld [vmem:[%s5 + $0x20] sm:$0xf]
    %v2091 = vld [vmem:[%s5 + $0x24] sm:$0xf]
    %v2092 = vld [vmem:[%s5 + $0x28] sm:$0xf]
    %v2093 = vld [vmem:[%s5 + $0x2c] sm:$0xf]
    %v2094 = vld [vmem:[%s5 + $0x30] sm:$0xf]
    %v2095 = vld [vmem:[%s5 + $0x34] sm:$0xf]
    %v2096 = vld [vmem:[%s5 + $0x38] sm:$0xf]
    %v2097 = vld [vmem:[%s5 + $0x3c] sm:$0xf]
    %v2098 = vld [vmem:[%s5 + $0x40] sm:$0xf]
    %v2099 = vld [vmem:[%s5 + $0x44] sm:$0xf]
    %v2100 = vld [vmem:[%s5 + $0x48] sm:$0xf]
    %v2101 = vld [vmem:[%s5 + $0x4c] sm:$0xf]
    %v2102 = vld [vmem:[%s5 + $0x50] sm:$0xf]
    %v2103 = vld [vmem:[%s5 + $0x54] sm:$0xf]
    %v2104 = vld [vmem:[%s5 + $0x58] sm:$0xf]
    %v2105 = vld [vmem:[%s5 + $0x5c] sm:$0xf]
    %v2106 = vld [vmem:[%s5 + $0x60] sm:$0xf]
    %v2107 = vld [vmem:[%s5 + $0x64] sm:$0xf]
    %v2108 = vld [vmem:[%s5 + $0x68] sm:$0xf]
    %v2109 = vld [vmem:[%s5 + $0x6c] sm:$0xf]
    %v2110 = vld [vmem:[%s5 + $0x70] sm:$0xf]
    %v2111 = vld [vmem:[%s5 + $0x74] sm:$0xf]
    %v2112 = vld [vmem:[%s5 + $0x78] sm:$0xf]
    %v2113 = vld [vmem:[%s5 + $0x7c] sm:$0xf]
    %v2114 = vld [vmem:[%s6] sm:$0x1]
    %v2116 = vlaneseq
    %v2117 = vshrl.u32 %v2116, 7
    %v2118 = vsub.s32 0, %v2117
    %v2119 = vrot.slane %v2114, %v2118
    %v2153 = vunpack.c.l.b16 %v2082
    %v2154 = vunpack.c.l.b16 %v2083
    %v2155 = vunpack.c.l.b16 %v2084
    %v2156 = vunpack.c.l.b16 %v2085
    %v2157 = vunpack.c.l.b16 %v2086
    %v2158 = vunpack.c.l.b16 %v2087
    %v2159 = vunpack.c.l.b16 %v2088
    %v2160 = vunpack.c.l.b16 %v2089
    %v2161 = vunpack.c.l.b16 %v2090
    %v2162 = vunpack.c.l.b16 %v2091
    %v2163 = vunpack.c.l.b16 %v2092
    %v2164 = vunpack.c.l.b16 %v2093
    %v2165 = vunpack.c.l.b16 %v2094
    %v2166 = vunpack.c.l.b16 %v2095
    %v2167 = vunpack.c.l.b16 %v2096
    %v2168 = vunpack.c.l.b16 %v2097
    %v2169 = vunpack.c.l.b16 %v2098
    %v2170 = vunpack.c.l.b16 %v2099
    %v2171 = vunpack.c.l.b16 %v2100
    %v2172 = vunpack.c.l.b16 %v2101
    %v2173 = vunpack.c.l.b16 %v2102
    %v2174 = vunpack.c.l.b16 %v2103
    %v2175 = vunpack.c.l.b16 %v2104
    %v2176 = vunpack.c.l.b16 %v2105
    %v2177 = vunpack.c.l.b16 %v2106
    %v2178 = vunpack.c.l.b16 %v2107
    %v2179 = vunpack.c.l.b16 %v2108
    %v2180 = vunpack.c.l.b16 %v2109
    %v2181 = vunpack.c.l.b16 %v2110
    %v2182 = vunpack.c.l.b16 %v2111
    %v2183 = vunpack.c.l.b16 %v2112
    %v2184 = vunpack.c.l.b16 %v2113
    %v2185 = vpack.c.b16 %v2154, %v2153
    %v2186 = vpack.c.b16 %v2156, %v2155
    %v2187 = vpack.c.b16 %v2158, %v2157
    %v2188 = vpack.c.b16 %v2160, %v2159
    %v2189 = vpack.c.b16 %v2162, %v2161
    %v2190 = vpack.c.b16 %v2164, %v2163
    %v2191 = vpack.c.b16 %v2166, %v2165
    %v2192 = vpack.c.b16 %v2168, %v2167
    %v2193 = vpack.c.b16 %v2170, %v2169
    %v2194 = vpack.c.b16 %v2172, %v2171
    %v2195 = vpack.c.b16 %v2174, %v2173
    %v2196 = vpack.c.b16 %v2176, %v2175
    %v2197 = vpack.c.b16 %v2178, %v2177
    %v2198 = vpack.c.b16 %v2180, %v2179
    %v2199 = vpack.c.b16 %v2182, %v2181
    %v2200 = vpack.c.b16 %v2184, %v2183
    %2217 = vmatprep.subr.bf16.mxu0 0
    %2218 = vmatpush1.bf16.msra.mxu0 %v2185
    %2219 = vmatprep.subr.bf16.mxu0 0
    %2220 = vmatpush1.bf16.msra.mxu0 %v2186
    %2221 = vmatprep.subr.bf16.mxu0 0
    %2222 = vmatpush1.bf16.msra.mxu0 %v2187
    %2223 = vmatprep.subr.bf16.mxu0 0
    %2224 = vmatpush1.bf16.msra.mxu0 %v2188
    %2225 = vmatprep.subr.bf16.mxu0 0
    %2226 = vmatpush1.bf16.msra.mxu0 %v2189
    %2227 = vmatprep.subr.bf16.mxu0 0
    %2228 = vmatpush1.bf16.msra.mxu0 %v2190
    %2229 = vmatprep.subr.bf16.mxu0 0
    %2230 = vmatpush1.bf16.msra.mxu0 %v2191
    %2231 = vmatprep.subr.bf16.mxu0 0
    %2232 = vmatpush1.bf16.msra.mxu0 %v2192
    %2233 = vmatprep.subr.bf16.mxu0 0
    %2234 = vmatpush1.bf16.msra.mxu0 %v2193
    %2235 = vmatprep.subr.bf16.mxu0 0
    %2236 = vmatpush1.bf16.msra.mxu0 %v2194
    %2237 = vmatprep.subr.bf16.mxu0 0
    %2238 = vmatpush1.bf16.msra.mxu0 %v2195
    %2239 = vmatprep.subr.bf16.mxu0 0
    %2240 = vmatpush1.bf16.msra.mxu0 %v2196
    %2241 = vmatprep.subr.bf16.mxu0 0
    %2242 = vmatpush1.bf16.msra.mxu0 %v2197
    %2243 = vmatprep.subr.bf16.mxu0 0
    %2244 = vmatpush1.bf16.msra.mxu0 %v2198
    %2245 = vmatprep.subr.bf16.mxu0 0
    %2246 = vmatpush1.bf16.msra.mxu0 %v2199
    %2247 = vmatprep.subr.bf16.mxu0 0
    %2248 = vmatpush1.bf16.msra.mxu0 %v2200
    %2249 = vmatprep.mubr.bf16.mxu0 %v2081
    %2250 = vmatmul.mubr.bf16.gmra.mrb[0].mxu0 %v2080
    %v2251 = vpop.f32.mrb[0].mxu0
    %v2252 = vadd.f32 %v2119, %v2251
    %v2253 = vpop.f32.mrb[0].mxu0
    %v2254 = vpop.f32.mrb[0].mxu0
    %v2255 = vpop.f32.mrb[0].mxu0
    %2256 = vdwg.mxu0
    %v2257 = vmax.f32 %v2252, 0.0
    %v2258 = vpack.c.bf16 %v2257, %v2257
    %v2259 = vld [vmem:[%s7] sm:$0xf]
    %v2260 = vld [vmem:[%s7 + $0x4] sm:$0xf]
    %v2261 = vld [vmem:[%s7 + $0x8] sm:$0xf]
    %v2262 = vld [vmem:[%s7 + $0xc] sm:$0xf]
    %v2263 = vld [vmem:[%s7 + $0x10] sm:$0xf]
    %v2264 = vld [vmem:[%s7 + $0x14] sm:$0xf]
    %v2265 = vld [vmem:[%s7 + $0x18] sm:$0xf]
    %v2266 = vld [vmem:[%s7 + $0x1c] sm:$0xf]
    %v2267 = vld [vmem:[%s7 + $0x20] sm:$0xf]
    %v2268 = vld [vmem:[%s7 + $0x24] sm:$0xf]
    %v2269 = vld [vmem:[%s7 + $0x28] sm:$0xf]
    %v2270 = vld [vmem:[%s7 + $0x2c] sm:$0xf]
    %v2271 = vld [vmem:[%s7 + $0x30] sm:$0xf]
    %v2272 = vld [vmem:[%s7 + $0x34] sm:$0xf]
    %v2273 = vld [vmem:[%s7 + $0x38] sm:$0xf]
    %v2274 = vld [vmem:[%s7 + $0x3c] sm:$0xf]
    %v2275 = vld [vmem:[%s8] sm:$0x1]
    %v2277 = vlaneseq
    %v2278 = vshrl.u32 %v2277, 7
    %v2279 = vsub.s32 0, %v2278
    %v2280 = vrot.slane %v2275, %v2279
    %v2298 = vunpack.c.l.b16 %v2259
    %v2299 = vunpack.c.l.b16 %v2260
    %v2300 = vunpack.c.l.b16 %v2261
    %v2301 = vunpack.c.l.b16 %v2262
    %v2302 = vunpack.c.l.b16 %v2263
    %v2303 = vunpack.c.l.b16 %v2264
    %v2304 = vunpack.c.l.b16 %v2265
    %v2305 = vunpack.c.l.b16 %v2266
    %v2306 = vunpack.c.l.b16 %v2267
    %v2307 = vunpack.c.l.b16 %v2268
    %v2308 = vunpack.c.l.b16 %v2269
    %v2309 = vunpack.c.l.b16 %v2270
    %v2310 = vunpack.c.l.b16 %v2271
    %v2311 = vunpack.c.l.b16 %v2272
    %v2312 = vunpack.c.l.b16 %v2273
    %v2313 = vunpack.c.l.b16 %v2274
    %v2314 = vpack.c.b16 %v2299, %v2298
    %v2315 = vpack.c.b16 %v2301, %v2300
    %v2316 = vpack.c.b16 %v2303, %v2302
    %v2317 = vpack.c.b16 %v2305, %v2304
    %v2318 = vpack.c.b16 %v2307, %v2306
    %v2319 = vpack.c.b16 %v2309, %v2308
    %v2320 = vpack.c.b16 %v2311, %v2310
    %v2321 = vpack.c.b16 %v2313, %v2312
    %2330 = vmatprep.subr.bf16.mxu0 0
    %2331 = vmatpush1.bf16.msra.mxu0 %v2314
    %2332 = vmatprep.subr.bf16.mxu0 0
    %2333 = vmatpush1.bf16.msra.mxu0 %v2315
    %2334 = vmatprep.subr.bf16.mxu0 0
    %2335 = vmatpush1.bf16.msra.mxu0 %v2316
    %2336 = vmatprep.subr.bf16.mxu0 0
    %2337 = vmatpush1.bf16.msra.mxu0 %v2317
    %2338 = vmatprep.subr.bf16.mxu0 0
    %2339 = vmatpush1.bf16.msra.mxu0 %v2318
    %2340 = vmatprep.subr.bf16.mxu0 0
    %2341 = vmatpush1.bf16.msra.mxu0 %v2319
    %2342 = vmatprep.subr.bf16.mxu0 0
    %2343 = vmatpush1.bf16.msra.mxu0 %v2320
    %2344 = vmatprep.subr.bf16.mxu0 0
    %2345 = vmatpush1.bf16.msra.mxu0 %v2321
    %2346 = vmatprep.subr.bf16.mxu0 0
    %2347 = vmatpush1.bf16.msra.mxu0 0
    %2348 = vmatprep.subr.bf16.mxu0 0
    %2349 = vmatpush1.bf16.msra.mxu0 0
    %2350 = vmatprep.subr.bf16.mxu0 0
    %2351 = vmatpush1.bf16.msra.mxu0 0
    %2352 = vmatprep.subr.bf16.mxu0 0
    %2353 = vmatpush1.bf16.msra.mxu0 0
    %2354 = vmatprep.subr.bf16.mxu0 0
    %2355 = vmatpush1.bf16.msra.mxu0 0
    %2356 = vmatprep.subr.bf16.mxu0 0
    %2357 = vmatpush1.bf16.msra.mxu0 0
    %2358 = vmatprep.subr.bf16.mxu0 0
    %2359 = vmatpush1.bf16.msra.mxu0 0
    %2360 = vmatprep.subr.bf16.mxu0 0
    %2361 = vmatpush1.bf16.msra.mxu0 0
    %2362 = vmatprep.mubr.bf16.mxu0 0
    %2363 = vmatmul.mubr.bf16.gmra.mrb[0].mxu0 %v2258
    %v2364 = vpop.f32.mrb[0].mxu0
    %v2365 = vadd.f32 %v2280, %v2364
    %v2366 = vpop.f32.mrb[0].mxu0
    %v2367 = vpop.f32.mrb[0].mxu0
    %v2368 = vpop.f32.mrb[0].mxu0
    %2369 = vdwg.mxu0
    %2370 = vst [vmem:[#allocation5] sm:$0xff] %v2365
    // Predicated region
    $region42: #{simple_mlp_forward.1} parent=1 // pred_check
      _
    $region43: #{simple_mlp_forward.1} parent=1 // pred_check_branch
      %2372 = sbr.rel (0) target = $region45
    $region44: #{simple_mlp_forward.1} parent=1 // pred_region
      %s2374 = ssub.s32 128, 128
      %2375 = vsyncadd [#allocation4], %s2374
      %s2377 = sshll.u32 [#allocation5], 4
      %s2378 = int_to_ptr.vmem [resolvable:$true] %s2377
      %2380 = dma.vmem_to_hbm [thread:$0]  %s2378, 128, %s9, [#allocation4]
    $region45: #{simple_mlp_forward.1} parent=1 // pred_fallthru
      _
    // Predicated region
    $region46: #{simple_mlp_forward.1} parent=1 // pred_check
      _
    $region47: #{simple_mlp_forward.1} parent=1 // pred_check_branch
      %2382 = sbr.rel (0) target = $region49
    $region48: #{simple_mlp_forward.1} parent=1 // pred_region
      %2383 = dma.done [#allocation4], 128
    $region49: #{simple_mlp_forward.1} parent=1 // pred_fallthru
      _
    %2384 = vsyncpa [#allocation3], 1
    %2385 = vsyncpa [#allocation4], 1

</llo_original>
